<compile_context>
chip_gen: v6e
topology: v6e:2x2x1
jax: 0.10.0
libtpu: 0.0.40
codegen_flags: <defaults>
</compile_context>

<pallas_src>
import math

import jax
import jax.numpy as jnp
from jax.experimental import pallas as pl
from jax.experimental.pallas import tpu as pltpu

EPS = 0.0          # dgl.nn.GINConv default (learn_eps=False, init_eps=0)
NEG = -3.0e38      # additive mask for non-edges (acts as -inf for the max)


def _round_up(n, m):
    return ((n + m - 1) // m) * m


def classifier_kernel(x_dst_ref, x_src_ref, ewt_ref, mbt_ref,
                      hasnbr_ref, roww_ref,
                      wg_ref, bg_ref, wh_ref, bh_ref,
                      out_ref,
                      agg_ref, gsum_ref):
    i = pl.program_id(0)           # dst-node tile
    j = pl.program_id(1)           # src-node tile (max-reduction axis)
    ni = pl.num_programs(0)
    nj = pl.num_programs(1)
    tm = ewt_ref.shape[1]          # static block shape: (ts, tm)

    @pl.when((i == 0) & (j == 0))
    def _init_graph():
        gsum_ref[...] = jnp.zeros_like(gsum_ref)
        out_ref[...] = jnp.zeros_like(out_ref)

    # ---- streaming GIN 'max' aggregation over this src tile -----------------
    # msg[r, s, d] = x_src[s, d] * ew[r, s] + mbias[r, s]
    # (mbias = 0 on edges / -3e38 on non-edges; folded on the host).
    # Loop over the tm dst rows of the tile (tm is small & static); each
    # iteration is a (ts, Dp) vector mul/add + a sublane max-reduce.
    x_src = x_src_ref[...]         # (ts, Dp)
    ewt = ewt_ref[...]             # (ts, tm)   edge weights, src-major
    mbt = mbt_ref[...]             # (ts, tm)   additive adjacency mask, src-major
    rows = []
    for r in range(tm):            # static unroll: tm iterations only
        m = jnp.max(x_src * ewt[:, r:r + 1] + mbt[:, r:r + 1],
                    axis=0, keepdims=True)        # (1, Dp)
        rows.append(m)
    tile_max = jnp.concatenate(rows, axis=0)      # (tm, Dp)

    @pl.when(j == 0)
    def _first_src_tile():
        agg_ref[...] = tile_max

    @pl.when(j != 0)
    def _running_max():
        agg_ref[...] = jnp.maximum(agg_ref[...], tile_max)

    # ---- per-dst-tile finalize: apply_func, residual, graph-mean partial ----
    @pl.when(j == nj - 1)
    def _finalize_tile():
        # DGL zero-fills nodes with no incoming edges.
        agg_f = jnp.where(hasnbr_ref[...] > 0.0, agg_ref[...], 0.0)
        x_dst = x_dst_ref[...]
        rst = (1.0 + EPS) * x_dst + agg_f
        node_out = jnp.dot(rst, wg_ref[...],
                           preferred_element_type=jnp.float32) + bg_ref[...]
        node_out = node_out + x_dst                       # residual from forward()
        # Masked mean: roww = 1/N for real rows, 0 for padded rows.
        gsum_ref[...] += jnp.sum(node_out * roww_ref[...], axis=0, keepdims=True)

    # ---- graph finalize: classification head ---------------------------------
    @pl.when((i == ni - 1) & (j == nj - 1))
    def _finalize_graph():
        out_ref[...] = jnp.dot(gsum_ref[...], wh_ref[...],
                               preferred_element_type=jnp.float32) + bh_ref[...]


def classifier_forward(lm_embedding, node_feat_extra, adj, edge_w, params,
                       *, dst_tile=8, src_tile=None):
    """lm_embedding: [1, L+2, H_lm]  (BertModel last_hidden_state stand-in)
       node_feat_extra: [N, F_extra] with N = L
       adj, edge_w: dense [N, N] in (dst, src) layout.
       dst_tile: dst rows per grid step (multiple of 8; raise for larger graphs).
       src_tile: src rows per grid step (multiple of 8), or None = all nodes."""
    f32 = jnp.float32
    # Glue: strip [CLS]/[SEP] rows, concat extra node features.
    # (kept host-side; at real ProtBert sizes D=1280 is already 128-lane aligned)
    x = jnp.concatenate([lm_embedding[0, 1:-1, :], node_feat_extra], axis=1).astype(f32)
    N, D = x.shape
    cls = params["head_b"].shape[-1]

    assert dst_tile % 8 == 0
    tm = dst_tile
    if src_tile is None:
        Np = _round_up(N, tm)
        ts = Np                              # one src block spanning all nodes
    else:
        assert src_tile % 8 == 0
        Np = _round_up(N, math.lcm(tm, src_tile))
        ts = src_tile
    Dp = _round_up(D, 128)                   # lane-pad feature axis
    Cp = _round_up(cls, 128)                 # lane-pad class axis (unmasked store)
    ni = Np // tm
    nj = Np // ts

    # --- host-side zero-padding + mask folding (exact — pads contribute 0) ---
    xp = jnp.zeros((Np, Dp), f32).at[:N, :D].set(x)
    ewp = jnp.zeros((Np, Np), f32).at[:N, :N].set(edge_w.astype(f32))
    adjp = jnp.zeros((Np, Np), f32).at[:N, :N].set(adj.astype(f32))
    mbias = jnp.where(adjp > 0.0, 0.0, NEG).astype(f32)                   # additive mask
    # (src, dst) layout, dst split into tiles with the tile index leading so the
    # kernel's per-dst-row column slices need no in-kernel transpose.
    ew_td = ewp.T.reshape(Np, ni, tm).transpose(1, 0, 2)                  # (ni, Np, tm)
    mb_td = mbias.T.reshape(Np, ni, tm).transpose(1, 0, 2)                # (ni, Np, tm)
    hasnbr = (jnp.sum(adjp, axis=1, keepdims=True) > 0.0).astype(f32)     # [Np, 1]
    roww = ((jnp.arange(Np) < N).astype(f32) / f32(N))[:, None]           # [Np, 1]

    wgp = jnp.zeros((Dp, Dp), f32).at[:D, :D].set(params["gin_w_t"].astype(f32))
    bgp = jnp.zeros((1, Dp), f32).at[:, :D].set(params["gin_b"].astype(f32))
    whp = jnp.zeros((Dp, Cp), f32).at[:D, :cls].set(params["head_w_t"].astype(f32))
    bhp = jnp.zeros((1, Cp), f32).at[:, :cls].set(params["head_b"].astype(f32))

    grid = (ni, nj)

    pred = pl.pallas_call(
        classifier_kernel,
        out_shape=jax.ShapeDtypeStruct((1, Cp), f32),
        grid_spec=pltpu.PrefetchScalarGridSpec(
            num_scalar_prefetch=0,
            grid=grid,
            in_specs=[
                pl.BlockSpec((tm, Dp), lambda i, j: (i, 0)),            # x  (dst rows)
                pl.BlockSpec((ts, Dp), lambda i, j: (j, 0)),            # x  (src rows)
                pl.BlockSpec((None, ts, tm), lambda i, j: (i, j, 0)),   # edge weights^T
                pl.BlockSpec((None, ts, tm), lambda i, j: (i, j, 0)),   # adj mask bias^T
                pl.BlockSpec((tm, 1), lambda i, j: (i, 0)),             # has-neighbour
                pl.BlockSpec((tm, 1), lambda i, j: (i, 0)),             # mean row weight
                pl.BlockSpec((Dp, Dp), lambda i, j: (0, 0)),            # gin W^T (resident)
                pl.BlockSpec((1, Dp), lambda i, j: (0, 0)),             # gin b
                pl.BlockSpec((Dp, Cp), lambda i, j: (0, 0)),            # head W^T
                pl.BlockSpec((1, Cp), lambda i, j: (0, 0)),             # head b
            ],
            out_specs=pl.BlockSpec((1, Cp), lambda i, j: (0, 0)),
            scratch_shapes=[
                pltpu.VMEM((tm, Dp), f32),    # running-max accumulator
                pltpu.VMEM((1, Dp), f32),     # graph-mean accumulator
            ],
        ),
        compiler_params=pltpu.CompilerParams(
            # Both the running max (src axis) and the graph mean / head output
            # (dst axis) accumulate across the grid, so both axes are reductions.
            dimension_semantics=("arbitrary", "arbitrary"),
            vmem_limit_bytes=32 * 1024 * 1024,
        ),
    )(xp, xp, ew_td, mb_td, hasnbr, roww, wgp, bgp, whp, bhp)

    return pred[0, :cls]      # 1-D pred, matches the PyTorch module


def reference_forward(lm_embedding, node_feat_extra, adj, edge_w, params):
    """Pure-JAX reference of the same forward (for a correctness check)."""
    x = jnp.concatenate([lm_embedding[0, 1:-1, :], node_feat_extra], axis=1).astype(jnp.float32)
    msg = x[None, :, :] * edge_w[:, :, None]
    masked = jnp.where(adj[:, :, None] > 0.0, msg, -jnp.inf)
    agg = jnp.max(masked, axis=1)
    agg = jnp.where(jnp.sum(adj, axis=1, keepdims=True) > 0.0, agg, 0.0)
    node_out = jnp.dot((1.0 + EPS) * x + agg, params["gin_w_t"]) + params["gin_b"]
    node_out = node_out + x
    graph_repre = jnp.mean(node_out, axis=0, keepdims=True)
    return (jnp.dot(graph_repre, params["head_w_t"]) + params["head_b"])[0]


if __name__ == "__main__":
    key = jax.random.PRNGKey(0)
    N, H_LM, F_EXTRA, CLS = 24, 24, 8, 2     # node_emb_size D = 32 (1280 in the real model)
    D = H_LM + F_EXTRA

    k = jax.random.split(key, 6)
    # Synthetic LM output (stands in for pretrained_lm(...).last_hidden_state,
    # includes the [CLS]/[SEP] rows that forward() strips).
    lm_embedding = jax.random.normal(k[0], (1, N + 2, H_LM), jnp.float32)
    node_feat = jax.random.normal(k[1], (N, F_EXTRA), jnp.float32)

    # Deterministic ring graph: edges j -> i for j = (i±1) mod N, (dst, src) layout.
    idx = jnp.arange(N)
    adj = ((idx[None, :] == (idx[:, None] + 1) % N) |
           (idx[None, :] == (idx[:, None] - 1) % N)).astype(jnp.float32)
    edge_w = jax.random.uniform(k[2], (N, N), jnp.float32, 0.5, 1.5) * adj

    params = {
        "gin_w_t":  jax.random.normal(k[3], (D, D), jnp.float32) / jnp.sqrt(D),
        "gin_b":    0.01 * jax.random.normal(k[4], (1, D), jnp.float32),
        "head_w_t": jax.random.normal(k[5], (D, CLS), jnp.float32) / jnp.sqrt(D),
        "head_b":   jnp.zeros((1, CLS), jnp.float32),
    }

    pred = classifier_forward(lm_embedding, node_feat, adj, edge_w, params,
                              dst_tile=8, src_tile=None)
    jax.block_until_ready(pred)
    assert pred.shape == (CLS,)

    ref = reference_forward(lm_embedding, node_feat, adj, edge_w, params)
    assert jnp.allclose(pred, ref, atol=2e-2, rtol=2e-2), (pred, ref)
    print("KERNEL_OK")
</pallas_src>

<mosaic_0001>
module attributes {stable_mosaic.version = 11 : i64} {
  func.func @classifier_kernel(%arg0: i32, %arg1: i32, %arg2: memref<8x128xf32, #tpu.memory_space<vmem>>, %arg3: memref<24x128xf32, #tpu.memory_space<vmem>>, %arg4: memref<1x24x8xf32, #tpu.memory_space<vmem>>, %arg5: memref<1x24x8xf32, #tpu.memory_space<vmem>>, %arg6: memref<8x1xf32, #tpu.memory_space<vmem>>, %arg7: memref<8x1xf32, #tpu.memory_space<vmem>>, %arg8: memref<128x128xf32, #tpu.memory_space<vmem>>, %arg9: memref<1x128xf32, #tpu.memory_space<vmem>>, %arg10: memref<128x128xf32, #tpu.memory_space<vmem>>, %arg11: memref<1x128xf32, #tpu.memory_space<vmem>>, %arg12: memref<1x128xf32, #tpu.memory_space<vmem>>, %arg13: memref<8x128xf32, #tpu.memory_space<vmem>>, %arg14: memref<1x128xf32, #tpu.memory_space<vmem>>) attributes {dimension_semantics = [#tpu.dimension_semantics<arbitrary>, #tpu.dimension_semantics<arbitrary>], iteration_bounds = array<i64: 3, 1>, scalar_prefetch = 0 : i64, scratch_operands = 2 : i64, tpu.core_type = #tpu.core_type<tc>, window_params = [{transform_indices = @transform_0, window_bounds = array<i64: 8, 128>}, {transform_indices = @transform_1, window_bounds = array<i64: 24, 128>}, {transform_indices = @transform_2, window_bounds = array<i64: 1, 24, 8>}, {transform_indices = @transform_3, window_bounds = array<i64: 1, 24, 8>}, {transform_indices = @transform_4, window_bounds = array<i64: 8, 1>}, {transform_indices = @transform_5, window_bounds = array<i64: 8, 1>}, {pipeline_mode = #tpu.pipeline_mode<synchronous>, transform_indices = @transform_6, window_bounds = array<i64: 128, 128>}, {pipeline_mode = #tpu.pipeline_mode<synchronous>, transform_indices = @transform_7, window_bounds = array<i64: 1, 128>}, {pipeline_mode = #tpu.pipeline_mode<synchronous>, transform_indices = @transform_8, window_bounds = array<i64: 128, 128>}, {pipeline_mode = #tpu.pipeline_mode<synchronous>, transform_indices = @transform_9, window_bounds = array<i64: 1, 128>}, {pipeline_mode = #tpu.pipeline_mode<synchronous>, transform_indices = @transform_10, window_bounds = array<i64: 1, 128>}]} {
    %c0_i32 = arith.constant 0 : i32
    %0 = arith.cmpi eq, %arg0, %c0_i32 : i32
    %c0_i32_0 = arith.constant 0 : i32
    %1 = arith.cmpi eq, %arg1, %c0_i32_0 : i32
    %2 = arith.andi %0, %1 : i1
    %3 = arith.extui %2 : i1 to i32
    %c0_i32_1 = arith.constant 0 : i32
    %4 = arith.cmpi ne, %3, %c0_i32_1 : i32
    scf.if %4 {
      %cst_24 = arith.constant 0.000000e+00 : f32
      %89 = vector.broadcast %cst_24 : f32 to vector<1x128xf32>
      %c0_25 = arith.constant 0 : index
      %c0_26 = arith.constant 0 : index
      %90 = vector.load %arg14[%c0_25, %c0_26] : memref<1x128xf32, #tpu.memory_space<vmem>>, vector<1x128xf32>
      tpu.vector_store %arg14[%c0_25, %c0_26], %89 {strides = array<i32>} : memref<1x128xf32, #tpu.memory_space<vmem>>, vector<1x128xf32>,
      %cst_27 = arith.constant 0.000000e+00 : f32
      %91 = vector.broadcast %cst_27 : f32 to vector<1x128xf32>
      %c0_28 = arith.constant 0 : index
      %c0_29 = arith.constant 0 : index
      %92 = vector.load %arg12[%c0_28, %c0_29] : memref<1x128xf32, #tpu.memory_space<vmem>>, vector<1x128xf32>
      tpu.vector_store %arg12[%c0_28, %c0_29], %91 {strides = array<i32>} : memref<1x128xf32, #tpu.memory_space<vmem>>, vector<1x128xf32>,
    } else {
    }
    %c0 = arith.constant 0 : index
    %c0_2 = arith.constant 0 : index
    %5 = vector.load %arg3[%c0, %c0_2] : memref<24x128xf32, #tpu.memory_space<vmem>>, vector<24x128xf32>
    %c0_3 = arith.constant 0 : index
    %c0_4 = arith.constant 0 : index
    %c0_5 = arith.constant 0 : index
    %6 = vector.load %arg4[%c0_3, %c0_4, %c0_5] : memref<1x24x8xf32, #tpu.memory_space<vmem>>, vector<1x24x8xf32>
    %7 = vector.shape_cast %6 : vector<1x24x8xf32> to vector<24x8xf32>
    %c0_6 = arith.constant 0 : index
    %c0_7 = arith.constant 0 : index
    %c0_8 = arith.constant 0 : index
    %8 = vector.load %arg5[%c0_6, %c0_7, %c0_8] : memref<1x24x8xf32, #tpu.memory_space<vmem>>, vector<1x24x8xf32>
    %9 = vector.shape_cast %8 : vector<1x24x8xf32> to vector<24x8xf32>
    %10 = vector.extract_strided_slice %7 {offsets = [0, 0], sizes = [24, 1], strides = [1, 1]} : vector<24x8xf32> to vector<24x1xf32>
    %11 = vector.broadcast %10 : vector<24x1xf32> to vector<24x128xf32>
    %12 = arith.mulf %5, %11 : vector<24x128xf32>
    %13 = vector.extract_strided_slice %9 {offsets = [0, 0], sizes = [24, 1], strides = [1, 1]} : vector<24x8xf32> to vector<24x1xf32>
    %14 = vector.broadcast %13 : vector<24x1xf32> to vector<24x128xf32>
    %15 = arith.addf %12, %14 : vector<24x128xf32>
    %cst = arith.constant dense<0xFF800000> : vector<128xf32>
    %16 = vector.multi_reduction <maximumf>, %15, %cst [0] : vector<24x128xf32> to vector<128xf32>
    %17 = vector.shape_cast %16 : vector<128xf32> to vector<1x128xf32>
    %18 = vector.extract_strided_slice %7 {offsets = [0, 1], sizes = [24, 1], strides = [1, 1]} : vector<24x8xf32> to vector<24x1xf32>
    %19 = vector.broadcast %18 : vector<24x1xf32> to vector<24x128xf32>
    %20 = arith.mulf %5, %19 : vector<24x128xf32>
    %21 = vector.extract_strided_slice %9 {offsets = [0, 1], sizes = [24, 1], strides = [1, 1]} : vector<24x8xf32> to vector<24x1xf32>
    %22 = vector.broadcast %21 : vector<24x1xf32> to vector<24x128xf32>
    %23 = arith.addf %20, %22 : vector<24x128xf32>
    %cst_9 = arith.constant dense<0xFF800000> : vector<128xf32>
    %24 = vector.multi_reduction <maximumf>, %23, %cst_9 [0] : vector<24x128xf32> to vector<128xf32>
    %25 = vector.shape_cast %24 : vector<128xf32> to vector<1x128xf32>
    %26 = vector.extract_strided_slice %7 {offsets = [0, 2], sizes = [24, 1], strides = [1, 1]} : vector<24x8xf32> to vector<24x1xf32>
    %27 = vector.broadcast %26 : vector<24x1xf32> to vector<24x128xf32>
    %28 = arith.mulf %5, %27 : vector<24x128xf32>
    %29 = vector.extract_strided_slice %9 {offsets = [0, 2], sizes = [24, 1], strides = [1, 1]} : vector<24x8xf32> to vector<24x1xf32>
    %30 = vector.broadcast %29 : vector<24x1xf32> to vector<24x128xf32>
    %31 = arith.addf %28, %30 : vector<24x128xf32>
    %cst_10 = arith.constant dense<0xFF800000> : vector<128xf32>
    %32 = vector.multi_reduction <maximumf>, %31, %cst_10 [0] : vector<24x128xf32> to vector<128xf32>
    %33 = vector.shape_cast %32 : vector<128xf32> to vector<1x128xf32>
    %34 = vector.extract_strided_slice %7 {offsets = [0, 3], sizes = [24, 1], strides = [1, 1]} : vector<24x8xf32> to vector<24x1xf32>
    %35 = vector.broadcast %34 : vector<24x1xf32> to vector<24x128xf32>
    %36 = arith.mulf %5, %35 : vector<24x128xf32>
    %37 = vector.extract_strided_slice %9 {offsets = [0, 3], sizes = [24, 1], strides = [1, 1]} : vector<24x8xf32> to vector<24x1xf32>
    %38 = vector.broadcast %37 : vector<24x1xf32> to vector<24x128xf32>
    %39 = arith.addf %36, %38 : vector<24x128xf32>
    %cst_11 = arith.constant dense<0xFF800000> : vector<128xf32>
    %40 = vector.multi_reduction <maximumf>, %39, %cst_11 [0] : vector<24x128xf32> to vector<128xf32>
    %41 = vector.shape_cast %40 : vector<128xf32> to vector<1x128xf32>
    %42 = vector.extract_strided_slice %7 {offsets = [0, 4], sizes = [24, 1], strides = [1, 1]} : vector<24x8xf32> to vector<24x1xf32>
    %43 = vector.broadcast %42 : vector<24x1xf32> to vector<24x128xf32>
    %44 = arith.mulf %5, %43 : vector<24x128xf32>
    %45 = vector.extract_strided_slice %9 {offsets = [0, 4], sizes = [24, 1], strides = [1, 1]} : vector<24x8xf32> to vector<24x1xf32>
    %46 = vector.broadcast %45 : vector<24x1xf32> to vector<24x128xf32>
    %47 = arith.addf %44, %46 : vector<24x128xf32>
    %cst_12 = arith.constant dense<0xFF800000> : vector<128xf32>
    %48 = vector.multi_reduction <maximumf>, %47, %cst_12 [0] : vector<24x128xf32> to vector<128xf32>
    %49 = vector.shape_cast %48 : vector<128xf32> to vector<1x128xf32>
    %50 = vector.extract_strided_slice %7 {offsets = [0, 5], sizes = [24, 1], strides = [1, 1]} : vector<24x8xf32> to vector<24x1xf32>
    %51 = vector.broadcast %50 : vector<24x1xf32> to vector<24x128xf32>
    %52 = arith.mulf %5, %51 : vector<24x128xf32>
    %53 = vector.extract_strided_slice %9 {offsets = [0, 5], sizes = [24, 1], strides = [1, 1]} : vector<24x8xf32> to vector<24x1xf32>
    %54 = vector.broadcast %53 : vector<24x1xf32> to vector<24x128xf32>
    %55 = arith.addf %52, %54 : vector<24x128xf32>
    %cst_13 = arith.constant dense<0xFF800000> : vector<128xf32>
    %56 = vector.multi_reduction <maximumf>, %55, %cst_13 [0] : vector<24x128xf32> to vector<128xf32>
    %57 = vector.shape_cast %56 : vector<128xf32> to vector<1x128xf32>
    %58 = vector.extract_strided_slice %7 {offsets = [0, 6], sizes = [24, 1], strides = [1, 1]} : vector<24x8xf32> to vector<24x1xf32>
    %59 = vector.broadcast %58 : vector<24x1xf32> to vector<24x128xf32>
    %60 = arith.mulf %5, %59 : vector<24x128xf32>
    %61 = vector.extract_strided_slice %9 {offsets = [0, 6], sizes = [24, 1], strides = [1, 1]} : vector<24x8xf32> to vector<24x1xf32>
    %62 = vector.broadcast %61 : vector<24x1xf32> to vector<24x128xf32>
    %63 = arith.addf %60, %62 : vector<24x128xf32>
    %cst_14 = arith.constant dense<0xFF800000> : vector<128xf32>
    %64 = vector.multi_reduction <maximumf>, %63, %cst_14 [0] : vector<24x128xf32> to vector<128xf32>
    %65 = vector.shape_cast %64 : vector<128xf32> to vector<1x128xf32>
    %66 = vector.extract_strided_slice %7 {offsets = [0, 7], sizes = [24, 1], strides = [1, 1]} : vector<24x8xf32> to vector<24x1xf32>
    %67 = vector.broadcast %66 : vector<24x1xf32> to vector<24x128xf32>
    %68 = arith.mulf %5, %67 : vector<24x128xf32>
    %69 = vector.extract_strided_slice %9 {offsets = [0, 7], sizes = [24, 1], strides = [1, 1]} : vector<24x8xf32> to vector<24x1xf32>
    %70 = vector.broadcast %69 : vector<24x1xf32> to vector<24x128xf32>
    %71 = arith.addf %68, %70 : vector<24x128xf32>
    %cst_15 = arith.constant dense<0xFF800000> : vector<128xf32>
    %72 = vector.multi_reduction <maximumf>, %71, %cst_15 [0] : vector<24x128xf32> to vector<128xf32>
    %73 = vector.shape_cast %72 : vector<128xf32> to vector<1x128xf32>
    %74 = tpu.concatenate %17, %25, %33, %41, %49, %57, %65, %73 in 0 : vector<1x128xf32>, vector<1x128xf32>, vector<1x128xf32>, vector<1x128xf32>, vector<1x128xf32>, vector<1x128xf32>, vector<1x128xf32>, vector<1x128xf32> -> vector<8x128xf32>
    %c0_i32_16 = arith.constant 0 : i32
    %75 = arith.cmpi eq, %arg1, %c0_i32_16 : i32
    %76 = arith.extui %75 : i1 to i32
    %c0_i32_17 = arith.constant 0 : i32
    %77 = arith.cmpi ne, %76, %c0_i32_17 : i32
    scf.if %77 {
      %c0_24 = arith.constant 0 : index
      %c0_25 = arith.constant 0 : index
      %89 = vector.load %arg13[%c0_24, %c0_25] : memref<8x128xf32, #tpu.memory_space<vmem>>, vector<8x128xf32>
      tpu.vector_store %arg13[%c0_24, %c0_25], %74 {strides = array<i32>} : memref<8x128xf32, #tpu.memory_space<vmem>>, vector<8x128xf32>,
    } else {
    }
    %c0_i32_18 = arith.constant 0 : i32
    %78 = arith.cmpi ne, %arg1, %c0_i32_18 : i32
    %79 = arith.extui %78 : i1 to i32
    %c0_i32_19 = arith.constant 0 : i32
    %80 = arith.cmpi ne, %79, %c0_i32_19 : i32
    scf.if %80 {
      %c0_24 = arith.constant 0 : index
      %c0_25 = arith.constant 0 : index
      %89 = vector.load %arg13[%c0_24, %c0_25] : memref<8x128xf32, #tpu.memory_space<vmem>>, vector<8x128xf32>
      %90 = arith.maximumf %89, %74 : vector<8x128xf32>
      %c0_26 = arith.constant 0 : index
      %c0_27 = arith.constant 0 : index
      %91 = vector.load %arg13[%c0_26, %c0_27] : memref<8x128xf32, #tpu.memory_space<vmem>>, vector<8x128xf32>
      tpu.vector_store %arg13[%c0_26, %c0_27], %90 {strides = array<i32>} : memref<8x128xf32, #tpu.memory_space<vmem>>, vector<8x128xf32>,
    } else {
    }
    %c0_i32_20 = arith.constant 0 : i32
    %81 = arith.cmpi eq, %arg1, %c0_i32_20 : i32
    %82 = arith.extui %81 : i1 to i32
    %c0_i32_21 = arith.constant 0 : i32
    %83 = arith.cmpi ne, %82, %c0_i32_21 : i32
    scf.if %83 {
      %c0_24 = arith.constant 0 : index
      %c0_25 = arith.constant 0 : index
      %89 = vector.load %arg6[%c0_24, %c0_25] : memref<8x1xf32, #tpu.memory_space<vmem>>, vector<8x1xf32>
      %cst_26 = arith.constant 0.000000e+00 : f32
      %90 = vector.broadcast %cst_26 : f32 to vector<8x1xf32>
      %91 = arith.cmpf ogt, %89, %90 : vector<8x1xf32>
      %c0_27 = arith.constant 0 : index
      %c0_28 = arith.constant 0 : index
      %92 = vector.load %arg13[%c0_27, %c0_28] : memref<8x128xf32, #tpu.memory_space<vmem>>, vector<8x128xf32>
      %cst_29 = arith.constant 0.000000e+00 : f32
      %93 = vector.shape_cast %91 : vector<8x1xi1> to vector<8x1xi1>
      %94 = vector.broadcast %93 : vector<8x1xi1> to vector<8x128xi1>
      %95 = vector.broadcast %cst_29 : f32 to vector<8x128xf32>
      %96 = arith.select %94, %92, %95 : vector<8x128xi1>, vector<8x128xf32>
      %c0_30 = arith.constant 0 : index
      %c0_31 = arith.constant 0 : index
      %97 = vector.load %arg2[%c0_30, %c0_31] : memref<8x128xf32, #tpu.memory_space<vmem>>, vector<8x128xf32>
      %cst_32 = arith.constant 1.000000e+00 : f32
      %98 = vector.broadcast %cst_32 : f32 to vector<8x128xf32>
      %99 = arith.mulf %98, %97 : vector<8x128xf32>
      %100 = arith.addf %99, %96 : vector<8x128xf32>
      %c0_33 = arith.constant 0 : index
      %c0_34 = arith.constant 0 : index
      %101 = vector.load %arg8[%c0_33, %c0_34] : memref<128x128xf32, #tpu.memory_space<vmem>>, vector<128x128xf32>
      %cst_35 = arith.constant dense<0.000000e+00> : vector<8x128xf32>
      %102 = tpu.matmul %100, %101, %cst_35 {dimension_numbers = #tpu.dot_dimension_numbers<[1], [0], [0], [1], [0, 0, 1, 1], [], []>} : vector<8x128xf32>, vector<128x128xf32>, vector<8x128xf32> -> vector<8x128xf32>
      %c0_36 = arith.constant 0 : index
      %c0_37 = arith.constant 0 : index
      %103 = vector.load %arg9[%c0_36, %c0_37] : memref<1x128xf32, #tpu.memory_space<vmem>>, vector<1x128xf32>
      %104 = vector.broadcast %103 : vector<1x128xf32> to vector<8x128xf32>
      %105 = arith.addf %102, %104 : vector<8x128xf32>
      %106 = arith.addf %105, %97 : vector<8x128xf32>
      %c0_38 = arith.constant 0 : index
      %c0_39 = arith.constant 0 : index
      %107 = vector.load %arg14[%c0_38, %c0_39] : memref<1x128xf32, #tpu.memory_space<vmem>>, vector<1x128xf32>
      %c0_40 = arith.constant 0 : index
      %c0_41 = arith.constant 0 : index
      %108 = vector.load %arg7[%c0_40, %c0_41] : memref<8x1xf32, #tpu.memory_space<vmem>>, vector<8x1xf32>
      %109 = vector.broadcast %108 : vector<8x1xf32> to vector<8x128xf32>
      %110 = arith.mulf %106, %109 : vector<8x128xf32>
      %cst_42 = arith.constant dense<0.000000e+00> : vector<128xf32>
      %111 = vector.multi_reduction <add>, %110, %cst_42 [0] : vector<8x128xf32> to vector<128xf32>
      %112 = vector.shape_cast %111 : vector<128xf32> to vector<1x128xf32>
      %113 = arith.addf %107, %112 : vector<1x128xf32>
      %c0_43 = arith.constant 0 : index
      %c0_44 = arith.constant 0 : index
      %114 = vector.load %arg14[%c0_43, %c0_44] : memref<1x128xf32, #tpu.memory_space<vmem>>, vector<1x128xf32>
      tpu.vector_store %arg14[%c0_43, %c0_44], %113 {strides = array<i32>} : memref<1x128xf32, #tpu.memory_space<vmem>>, vector<1x128xf32>,
    } else {
    }
    %c2_i32 = arith.constant 2 : i32
    %84 = arith.cmpi eq, %arg0, %c2_i32 : i32
    %c0_i32_22 = arith.constant 0 : i32
    %85 = arith.cmpi eq, %arg1, %c0_i32_22 : i32
    %86 = arith.andi %84, %85 : i1
    %87 = arith.extui %86 : i1 to i32
    %c0_i32_23 = arith.constant 0 : i32
    %88 = arith.cmpi ne, %87, %c0_i32_23 : i32
    scf.if %88 {
      %c0_24 = arith.constant 0 : index
      %c0_25 = arith.constant 0 : index
      %89 = vector.load %arg14[%c0_24, %c0_25] : memref<1x128xf32, #tpu.memory_space<vmem>>, vector<1x128xf32>
      %c0_26 = arith.constant 0 : index
      %c0_27 = arith.constant 0 : index
      %90 = vector.load %arg10[%c0_26, %c0_27] : memref<128x128xf32, #tpu.memory_space<vmem>>, vector<128x128xf32>
      %cst_28 = arith.constant dense<0.000000e+00> : vector<1x128xf32>
      %91 = tpu.matmul %89, %90, %cst_28 {dimension_numbers = #tpu.dot_dimension_numbers<[1], [0], [0], [1], [0, 0, 1, 1], [], []>} : vector<1x128xf32>, vector<128x128xf32>, vector<1x128xf32> -> vector<1x128xf32>
      %c0_29 = arith.constant 0 : index
      %c0_30 = arith.constant 0 : index
      %92 = vector.load %arg11[%c0_29, %c0_30] : memref<1x128xf32, #tpu.memory_space<vmem>>, vector<1x128xf32>
      %93 = arith.addf %91, %92 : vector<1x128xf32>
      %c0_31 = arith.constant 0 : index
      %c0_32 = arith.constant 0 : index
      %94 = vector.load %arg12[%c0_31, %c0_32] : memref<1x128xf32, #tpu.memory_space<vmem>>, vector<1x128xf32>
      tpu.vector_store %arg12[%c0_31, %c0_32], %93 {strides = array<i32>} : memref<1x128xf32, #tpu.memory_space<vmem>>, vector<1x128xf32>,
    } else {
    }
    return
  }
  func.func @transform_0(%arg0: i32, %arg1: i32) -> (i32, i32) {
    %c0_i32 = arith.constant 0 : i32
    %c0_i32_0 = arith.constant 0 : i32
    return %arg0, %c0_i32 : i32, i32
  }
  func.func @transform_1(%arg0: i32, %arg1: i32) -> (i32, i32) {
    %c0_i32 = arith.constant 0 : i32
    %c0_i32_0 = arith.constant 0 : i32
    return %arg1, %c0_i32 : i32, i32
  }
  func.func @transform_2(%arg0: i32, %arg1: i32) -> (i32, i32, i32) {
    %c0_i32 = arith.constant 0 : i32
    %c0_i32_0 = arith.constant 0 : i32
    return %arg0, %arg1, %c0_i32 : i32, i32, i32
  }
  func.func @transform_3(%arg0: i32, %arg1: i32) -> (i32, i32, i32) {
    %c0_i32 = arith.constant 0 : i32
    %c0_i32_0 = arith.constant 0 : i32
    return %arg0, %arg1, %c0_i32 : i32, i32, i32
  }
  func.func @transform_4(%arg0: i32, %arg1: i32) -> (i32, i32) {
    %c0_i32 = arith.constant 0 : i32
    %c0_i32_0 = arith.constant 0 : i32
    return %arg0, %c0_i32 : i32, i32
  }
  func.func @transform_5(%arg0: i32, %arg1: i32) -> (i32, i32) {
    %c0_i32 = arith.constant 0 : i32
    %c0_i32_0 = arith.constant 0 : i32
    return %arg0, %c0_i32 : i32, i32
  }
  func.func @transform_6(%arg0: i32, %arg1: i32) -> (i32, i32) {
    %c0_i32 = arith.constant 0 : i32
    %c0_i32_0 = arith.constant 0 : i32
    %c0_i32_1 = arith.constant 0 : i32
    return %c0_i32, %c0_i32_0 : i32, i32
  }
  func.func @transform_7(%arg0: i32, %arg1: i32) -> (i32, i32) {
    %c0_i32 = arith.constant 0 : i32
    %c0_i32_0 = arith.constant 0 : i32
    %c0_i32_1 = arith.constant 0 : i32
    return %c0_i32, %c0_i32_0 : i32, i32
  }
  func.func @transform_8(%arg0: i32, %arg1: i32) -> (i32, i32) {
    %c0_i32 = arith.constant 0 : i32
    %c0_i32_0 = arith.constant 0 : i32
    %c0_i32_1 = arith.constant 0 : i32
    return %c0_i32, %c0_i32_0 : i32, i32
  }
  func.func @transform_9(%arg0: i32, %arg1: i32) -> (i32, i32) {
    %c0_i32 = arith.constant 0 : i32
    %c0_i32_0 = arith.constant 0 : i32
    %c0_i32_1 = arith.constant 0 : i32
    return %c0_i32, %c0_i32_0 : i32, i32
  }
  func.func @transform_10(%arg0: i32, %arg1: i32) -> (i32, i32) {
    %c0_i32 = arith.constant 0 : i32
    %c0_i32_0 = arith.constant 0 : i32
    %c0_i32_1 = arith.constant 0 : i32
    return %c0_i32, %c0_i32_0 : i32, i32
  }
}

</mosaic_0001>

<llo_original>
// kernel: tpu_custom_call.1
$region0: #{tpu_custom_call.1}
  #allocation0 [shape = 'u32[]', space=smem, size = 0x4, offset = 0x4, fixed_abs, tag = 'smem constant byte address 0x4 - core index']
  #allocation1 [shape = 'u32[144,128]{1,0:T(1,128)}', space=vmem, size = 0x12000, scoped, tag = 'internal scratch']
  #allocation2 [shape = 'f32[8,128]{1,0:T(8,128)}', space=vmem, size = 0x1000, scoped, tag = 'scratch operand']
  #allocation3 [shape = 'f32[1,128]{1,0:T(1,128)}', space=vmem, size = 0x200, scoped, tag = 'scratch operand']
  %s0 = inlined_call_operand.hbm [shape: f32[24,128], index: 0, kind: input, shape index: {}]
  %s1 = inlined_call_operand.hbm [shape: f32[24,128], index: 1, kind: input, shape index: {}]
  %s2 = inlined_call_operand.vmem [shape: f32[3,24,8], index: 2, kind: input, shape index: {}]
  %s3 = inlined_call_operand.vmem [shape: f32[3,24,8], index: 3, kind: input, shape index: {}]
  %s4 = inlined_call_operand.vmem [shape: f32[24,1], index: 4, kind: input, shape index: {}]
  %s5 = inlined_call_operand.vmem [shape: f32[24,1], index: 5, kind: input, shape index: {}]
  %s6 = inlined_call_operand.vmem [shape: f32[128,128], index: 6, kind: input, shape index: {}]
  %s7 = inlined_call_operand.hbm [shape: f32[1,128], index: 7, kind: input, shape index: {}]
  %s8 = inlined_call_operand.vmem [shape: f32[128,128], index: 8, kind: input, shape index: {}]
  %s9 = inlined_call_operand.hbm [shape: f32[1,128], index: 9, kind: input, shape index: {}]
  %s10 = inlined_call_operand.hbm [shape: f32[1,128], index: 10, kind: output, shape index: {}]
  %s11 = sld [smem:[#allocation0]]
  $region109: #{tpu_custom_call.1} parent=0
    _
  %s13 = ssub.s32 1, %s11
  %s14 = scalar_select 0, %s13, %s11
  $region1: #{tpu_custom_call.1} parent=0
    #allocation4 [shape = 'u8[8192]{0}', space=vmem, size = 0x2000, scoped, tag = 'input window, operand 0']
    #allocation5 [shape = 's32[2]{0}', space=sflag, size = 0x8, scoped, tag = 'scoped memory for tpu_custom_call.1']
    #allocation6 [shape = 's32[2]{0}', space=sflag, size = 0x8, scoped, tag = 'scoped memory for tpu_custom_call.1']
    #allocation7 [shape = 'u8[12288]{0}', space=vmem, size = 0x3000, scoped, tag = 'input window, operand 1, single buffered']
    #allocation8 [shape = 's32[1]{0}', space=sflag, size = 0x4, scoped, tag = 'scoped memory for tpu_custom_call.1']
    #allocation9 [shape = 'u8[512]{0}', space=vmem, size = 0x400, scoped, tag = 'input window, operand 7, single buffered']
    #allocation10 [shape = 'u8[512]{0}', space=vmem, size = 0x400, scoped, tag = 'input window, operand 9, single buffered']
    #allocation11 [shape = 's32[1]{0}', space=sflag, size = 0x4, scoped, tag = 'scoped memory for tpu_custom_call.1']
    #allocation12 [shape = 'u8[512]{0}', space=vmem, size = 0x400, scoped, tag = 'output window, operand 0, single buffered']
    %15 = vsyncpa [#allocation5], 0
    %s16 = scalar_lea.sflag [#allocation5], 1
    %17 = vsyncpa %s16, 0
    %18 = vsyncpa [#allocation8], 0
    %19 = vsyncpa [#allocation11], 0
    %20 = vsyncpa [#allocation6], 0
    loop: start=0, step=1, limit=5
    $region2: #{tpu_custom_call.1} parent=1 // loop_pre_header
      _
    $region3: #{tpu_custom_call.1} parent=1 // loop_header
      %s22 = sphi 0, %s26
      %p23 = scmp.ge.s32.totalorder %s22, 5
      %s29 = sphi 0, %s41
      %s30 = sphi 0, %s37
      %s31 = sphi 0, %s29
      %s32 = sphi 0, %s30
      %s33 = sphi 0, %s31
      %s34 = sphi 0, %s32
      %s44 = sphi 0, %s46
      %s47 = sphi 0, %s44
      %s48 = sphi 0, %s47
      %s64 = sphi 0, %s48
      %s70 = sphi 0, %s72
      %s73 = sphi 0, %s70
      %s74 = sphi 0, %s73
      %s90 = sphi 0, %s74
      %s98 = sphi 0, %s100
      %s101 = sphi 0, %s98
      %s102 = sphi 0, %s101
      %s118 = sphi 0, %s102
      %s126 = sphi 0, %s128
      %s129 = sphi 0, %s126
      %s130 = sphi 0, %s129
      %s146 = sphi 0, %s130
      %s152 = sphi 0, %s154
      %s155 = sphi 0, %s152
      %s156 = sphi 0, %s155
      %s172 = sphi 0, %s156
      %s178 = sphi 0, %s180
      %s181 = sphi 0, %s178
      %s182 = sphi 0, %s181
      %s198 = sphi 0, %s182
      %s202 = sphi 0, %s202
      %s204 = sphi 0, %s202
      %s205 = sphi 0, %s204
      %s219 = sphi 0, %s205
      %s223 = sphi 0, %s223
      %s225 = sphi 0, %s223
      %s226 = sphi 0, %s225
      %s240 = sphi 0, %s226
      %s244 = sphi 0, %s244
      %s246 = sphi 0, %s244
      %s247 = sphi 0, %s246
      %s261 = sphi 0, %s247
      %s265 = sphi 0, %s265
      %s267 = sphi 0, %s265
      %s268 = sphi 0, %s267
      %s282 = sphi 0, %s268
      %s286 = sphi 0, %s286
      %s288 = sphi 0, %s286
      %s289 = sphi 0, %s288
      %s303 = sphi 0, %s289
    $region4: #{tpu_custom_call.1} parent=1 // loop_header_branch
      %25 = sbr.rel (%p23) target = $region8
    $region5: #{tpu_custom_call.1} parent=1 // loop_body
      %s27 = ssub.s32 %s22, 1
      %s28 = ssub.s32 %s22, 2
      %s35 = sadd.s32 1, %s30
      %p36 = scmp.ge.s32.totalorder %s35, 1
      %s37 = scalar_select %p36, 0, %s35
      %s38 = sadd.s32 1, %s29
      %s39 = scalar_select %p36, %s38, %s29
      %p40 = scmp.ge.s32.totalorder %s39, 3
      %s41 = scalar_select %p40, 0, %s39
      %s42 = ssub.s32 %s29, %s41
      %p43 = scmp.eq.s32.totalorder %s42, 0
      %s45 = sadd.s32 %s44, 1
      %s46 = scalar_select %p43, %s44, %s45
      %p49 = pneg %p43
      %p50 = scmp.eq.s32.totalorder %s22, 2
      %p51 = por %p49, %p50
      %p52 = scmp.ne.s32.totalorder %s44, %s47
      %p53 = scmp.eq.s32.totalorder %s22, 0
      %p54 = por %p52, %p53
      %p55 = scmp.ne.s32.totalorder %s44, %s47
      %p56 = scmp.eq.s32.totalorder %s27, 2
      %p57 = por %p55, %p56
      %p58 = scmp.ne.s32.totalorder %s47, %s48
      %p59 = scmp.eq.s32.totalorder %s27, 0
      %p60 = por %p58, %p59
      %p61 = scmp.ne.s32.totalorder %s47, %s48
      %p62 = scmp.eq.s32.totalorder %s28, 2
      %p63 = por %p61, %p62
      %p65 = scmp.ne.s32.totalorder %s48, %s64
      %p66 = scmp.eq.s32.totalorder %s28, 0
      %p67 = por %p65, %p66
      %s68 = ssub.s32 %s30, %s37
      %p69 = scmp.eq.s32.totalorder %s68, 0
      %s71 = sadd.s32 %s70, 1
      %s72 = scalar_select %p69, %s70, %s71
      %p75 = pneg %p69
      %p76 = scmp.eq.s32.totalorder %s22, 2
      %p77 = por %p75, %p76
      %p78 = scmp.ne.s32.totalorder %s70, %s73
      %p79 = scmp.eq.s32.totalorder %s22, 0
      %p80 = por %p78, %p79
      %p81 = scmp.ne.s32.totalorder %s70, %s73
      %p82 = scmp.eq.s32.totalorder %s27, 2
      %p83 = por %p81, %p82
      %p84 = scmp.ne.s32.totalorder %s73, %s74
      %p85 = scmp.eq.s32.totalorder %s27, 0
      %p86 = por %p84, %p85
      %p87 = scmp.ne.s32.totalorder %s73, %s74
      %p88 = scmp.eq.s32.totalorder %s28, 2
      %p89 = por %p87, %p88
      %p91 = scmp.ne.s32.totalorder %s74, %s90
      %p92 = scmp.eq.s32.totalorder %s28, 0
      %p93 = por %p91, %p92
      %s94 = ssub.s32 %s29, %s41
      %s95 = ssub.s32 %s30, %s37
      %s96 = sor.u32 %s94, %s95
      %p97 = scmp.eq.s32.totalorder %s96, 0
      %s99 = sadd.s32 %s98, 1
      %s100 = scalar_select %p97, %s98, %s99
      %p103 = pneg %p97
      %p104 = scmp.eq.s32.totalorder %s22, 2
      %p105 = por %p103, %p104
      %p106 = scmp.ne.s32.totalorder %s98, %s101
      %p107 = scmp.eq.s32.totalorder %s22, 0
      %p108 = por %p106, %p107
      %p109 = scmp.ne.s32.totalorder %s98, %s101
      %p110 = scmp.eq.s32.totalorder %s27, 2
      %p111 = por %p109, %p110
      %p112 = scmp.ne.s32.totalorder %s101, %s102
      %p113 = scmp.eq.s32.totalorder %s27, 0
      %p114 = por %p112, %p113
      %p115 = scmp.ne.s32.totalorder %s101, %s102
      %p116 = scmp.eq.s32.totalorder %s28, 2
      %p117 = por %p115, %p116
      %p119 = scmp.ne.s32.totalorder %s102, %s118
      %p120 = scmp.eq.s32.totalorder %s28, 0
      %p121 = por %p119, %p120
      %s122 = ssub.s32 %s29, %s41
      %s123 = ssub.s32 %s30, %s37
      %s124 = sor.u32 %s122, %s123
      %p125 = scmp.eq.s32.totalorder %s124, 0
      %s127 = sadd.s32 %s126, 1
      %s128 = scalar_select %p125, %s126, %s127
      %p131 = pneg %p125
      %p132 = scmp.eq.s32.totalorder %s22, 2
      %p133 = por %p131, %p132
      %p134 = scmp.ne.s32.totalorder %s126, %s129
      %p135 = scmp.eq.s32.totalorder %s22, 0
      %p136 = por %p134, %p135
      %p137 = scmp.ne.s32.totalorder %s126, %s129
      %p138 = scmp.eq.s32.totalorder %s27, 2
      %p139 = por %p137, %p138
      %p140 = scmp.ne.s32.totalorder %s129, %s130
      %p141 = scmp.eq.s32.totalorder %s27, 0
      %p142 = por %p140, %p141
      %p143 = scmp.ne.s32.totalorder %s129, %s130
      %p144 = scmp.eq.s32.totalorder %s28, 2
      %p145 = por %p143, %p144
      %p147 = scmp.ne.s32.totalorder %s130, %s146
      %p148 = scmp.eq.s32.totalorder %s28, 0
      %p149 = por %p147, %p148
      %s150 = ssub.s32 %s29, %s41
      %p151 = scmp.eq.s32.totalorder %s150, 0
      %s153 = sadd.s32 %s152, 1
      %s154 = scalar_select %p151, %s152, %s153
      %p157 = pneg %p151
      %p158 = scmp.eq.s32.totalorder %s22, 2
      %p159 = por %p157, %p158
      %p160 = scmp.ne.s32.totalorder %s152, %s155
      %p161 = scmp.eq.s32.totalorder %s22, 0
      %p162 = por %p160, %p161
      %p163 = scmp.ne.s32.totalorder %s152, %s155
      %p164 = scmp.eq.s32.totalorder %s27, 2
      %p165 = por %p163, %p164
      %p166 = scmp.ne.s32.totalorder %s155, %s156
      %p167 = scmp.eq.s32.totalorder %s27, 0
      %p168 = por %p166, %p167
      %p169 = scmp.ne.s32.totalorder %s155, %s156
      %p170 = scmp.eq.s32.totalorder %s28, 2
      %p171 = por %p169, %p170
      %p173 = scmp.ne.s32.totalorder %s156, %s172
      %p174 = scmp.eq.s32.totalorder %s28, 0
      %p175 = por %p173, %p174
      %s176 = ssub.s32 %s29, %s41
      %p177 = scmp.eq.s32.totalorder %s176, 0
      %s179 = sadd.s32 %s178, 1
      %s180 = scalar_select %p177, %s178, %s179
      %p183 = pneg %p177
      %p184 = scmp.eq.s32.totalorder %s22, 2
      %p185 = por %p183, %p184
      %p186 = scmp.ne.s32.totalorder %s178, %s181
      %p187 = scmp.eq.s32.totalorder %s22, 0
      %p188 = por %p186, %p187
      %p189 = scmp.ne.s32.totalorder %s178, %s181
      %p190 = scmp.eq.s32.totalorder %s27, 2
      %p191 = por %p189, %p190
      %p192 = scmp.ne.s32.totalorder %s181, %s182
      %p193 = scmp.eq.s32.totalorder %s27, 0
      %p194 = por %p192, %p193
      %p195 = scmp.ne.s32.totalorder %s181, %s182
      %p196 = scmp.eq.s32.totalorder %s28, 2
      %p197 = por %p195, %p196
      %p199 = scmp.ne.s32.totalorder %s182, %s198
      %p200 = scmp.eq.s32.totalorder %s28, 0
      %p201 = por %p199, %p200
      %s203 = sadd.s32 %s202, 1
      %p206 = scmp.eq.s32.totalorder %s22, 2
      %p207 = scmp.ne.s32.totalorder %s202, %s204
      %p208 = scmp.eq.s32.totalorder %s22, 0
      %p209 = por %p207, %p208
      %p210 = scmp.ne.s32.totalorder %s202, %s204
      %p211 = scmp.eq.s32.totalorder %s27, 2
      %p212 = por %p210, %p211
      %p213 = scmp.ne.s32.totalorder %s204, %s205
      %p214 = scmp.eq.s32.totalorder %s27, 0
      %p215 = por %p213, %p214
      %p216 = scmp.ne.s32.totalorder %s204, %s205
      %p217 = scmp.eq.s32.totalorder %s28, 2
      %p218 = por %p216, %p217
      %p220 = scmp.ne.s32.totalorder %s205, %s219
      %p221 = scmp.eq.s32.totalorder %s28, 0
      %p222 = por %p220, %p221
      %s224 = sadd.s32 %s223, 1
      %p227 = scmp.eq.s32.totalorder %s22, 2
      %p228 = scmp.ne.s32.totalorder %s223, %s225
      %p229 = scmp.eq.s32.totalorder %s22, 0
      %p230 = por %p228, %p229
      %p231 = scmp.ne.s32.totalorder %s223, %s225
      %p232 = scmp.eq.s32.totalorder %s27, 2
      %p233 = por %p231, %p232
      %p234 = scmp.ne.s32.totalorder %s225, %s226
      %p235 = scmp.eq.s32.totalorder %s27, 0
      %p236 = por %p234, %p235
      %p237 = scmp.ne.s32.totalorder %s225, %s226
      %p238 = scmp.eq.s32.totalorder %s28, 2
      %p239 = por %p237, %p238
      %p241 = scmp.ne.s32.totalorder %s226, %s240
      %p242 = scmp.eq.s32.totalorder %s28, 0
      %p243 = por %p241, %p242
      %s245 = sadd.s32 %s244, 1
      %p248 = scmp.eq.s32.totalorder %s22, 2
      %p249 = scmp.ne.s32.totalorder %s244, %s246
      %p250 = scmp.eq.s32.totalorder %s22, 0
      %p251 = por %p249, %p250
      %p252 = scmp.ne.s32.totalorder %s244, %s246
      %p253 = scmp.eq.s32.totalorder %s27, 2
      %p254 = por %p252, %p253
      %p255 = scmp.ne.s32.totalorder %s246, %s247
      %p256 = scmp.eq.s32.totalorder %s27, 0
      %p257 = por %p255, %p256
      %p258 = scmp.ne.s32.totalorder %s246, %s247
      %p259 = scmp.eq.s32.totalorder %s28, 2
      %p260 = por %p258, %p259
      %p262 = scmp.ne.s32.totalorder %s247, %s261
      %p263 = scmp.eq.s32.totalorder %s28, 0
      %p264 = por %p262, %p263
      %s266 = sadd.s32 %s265, 1
      %p269 = scmp.eq.s32.totalorder %s22, 2
      %p270 = scmp.ne.s32.totalorder %s265, %s267
      %p271 = scmp.eq.s32.totalorder %s22, 0
      %p272 = por %p270, %p271
      %p273 = scmp.ne.s32.totalorder %s265, %s267
      %p274 = scmp.eq.s32.totalorder %s27, 2
      %p275 = por %p273, %p274
      %p276 = scmp.ne.s32.totalorder %s267, %s268
      %p277 = scmp.eq.s32.totalorder %s27, 0
      %p278 = por %p276, %p277
      %p279 = scmp.ne.s32.totalorder %s267, %s268
      %p280 = scmp.eq.s32.totalorder %s28, 2
      %p281 = por %p279, %p280
      %p283 = scmp.ne.s32.totalorder %s268, %s282
      %p284 = scmp.eq.s32.totalorder %s28, 0
      %p285 = por %p283, %p284
      %s287 = sadd.s32 %s286, 1
      %p290 = scmp.eq.s32.totalorder %s22, 2
      %p291 = scmp.ne.s32.totalorder %s286, %s288
      %p292 = scmp.eq.s32.totalorder %s22, 0
      %p293 = por %p291, %p292
      %p294 = scmp.ne.s32.totalorder %s286, %s288
      %p295 = scmp.eq.s32.totalorder %s27, 2
      %p296 = por %p294, %p295
      %p297 = scmp.ne.s32.totalorder %s288, %s289
      %p298 = scmp.eq.s32.totalorder %s27, 0
      %p299 = por %p297, %p298
      %p300 = scmp.ne.s32.totalorder %s288, %s289
      %p301 = scmp.eq.s32.totalorder %s28, 2
      %p302 = por %p300, %p301
      %p304 = scmp.ne.s32.totalorder %s289, %s303
      %p305 = scmp.eq.s32.totalorder %s28, 0
      %p306 = por %p304, %p305
      %p307 = scmp.le.s32.totalorder 1, %s22
      %p308 = scmp.lt.s32.totalorder %s22, 4
      %p309 = pnand %p307, %p308
      %p310 = pneg %p309
      // Predicated region
      $region9: #{tpu_custom_call.1} parent=5 // pred_check
        _
      $region10: #{tpu_custom_call.1} parent=5 // pred_check_branch
        %312 = sbr.rel (%p309) target = $region12
      $region11: #{tpu_custom_call.1} parent=5 // pred_region
        %s313 = ssub.s32 %s22, 1
        // Predicated region
        $region13: #{tpu_custom_call.1} parent=11 // pred_check
          %p314 = pneg %p86
        $region14: #{tpu_custom_call.1} parent=11 // pred_check_branch
          %316 = sbr.rel (%p314) target = $region16
        $region15: #{tpu_custom_call.1} parent=11 // pred_region
          %s317 = smul.u32 3, %s32
          %s319 = ssub.s32 384, 384
          %320 = vsyncadd [#allocation8], %s319
          %s321 = smul.addr %s317, 128
          %s322 = scalar_lea.hbm %s1, %s321
          %s323 = sshll.u32 [#allocation7], 4
          %s324 = int_to_ptr.vmem [resolvable:$true] %s323
          %329 = dma.hbm_to_vmem [thread:$0]  %s322, 384, %s324, [#allocation8], 128, 128, 8
        $region16: #{tpu_custom_call.1} parent=11 // pred_fallthru
          _
        // Predicated region
        $region17: #{tpu_custom_call.1} parent=11 // pred_check
          %p330 = pneg %p215
        $region18: #{tpu_custom_call.1} parent=11 // pred_check_branch
          %332 = sbr.rel (%p330) target = $region20
        $region19: #{tpu_custom_call.1} parent=11 // pred_region
          _
        $region20: #{tpu_custom_call.1} parent=11 // pred_fallthru
          _
        // Predicated region
        $region21: #{tpu_custom_call.1} parent=11 // pred_check
          %p333 = pneg %p236
        $region22: #{tpu_custom_call.1} parent=11 // pred_check_branch
          %335 = sbr.rel (%p333) target = $region24
        $region23: #{tpu_custom_call.1} parent=11 // pred_region
          %s337 = ssub.s32 16, 16
          %338 = vsyncadd [#allocation8], %s337
          %s340 = sshll.u32 [#allocation9], 4
          %s341 = int_to_ptr.vmem [resolvable:$true] %s340
          %343 = dma.hbm_to_vmem [thread:$0]  %s7, 16, %s341, [#allocation8]
        $region24: #{tpu_custom_call.1} parent=11 // pred_fallthru
          _
        // Predicated region
        $region25: #{tpu_custom_call.1} parent=11 // pred_check
          %p344 = pneg %p257
        $region26: #{tpu_custom_call.1} parent=11 // pred_check_branch
          %346 = sbr.rel (%p344) target = $region28
        $region27: #{tpu_custom_call.1} parent=11 // pred_region
          _
        $region28: #{tpu_custom_call.1} parent=11 // pred_fallthru
          _
        // Predicated region
        $region29: #{tpu_custom_call.1} parent=11 // pred_check
          %p347 = pneg %p278
        $region30: #{tpu_custom_call.1} parent=11 // pred_check_branch
          %349 = sbr.rel (%p347) target = $region32
        $region31: #{tpu_custom_call.1} parent=11 // pred_region
          %s351 = ssub.s32 16, 16
          %352 = vsyncadd [#allocation11], %s351
          %s354 = sshll.u32 [#allocation10], 4
          %s355 = int_to_ptr.vmem [resolvable:$true] %s354
          %357 = dma.hbm_to_vmem [thread:$0]  %s9, 16, %s355, [#allocation11]
        $region32: #{tpu_custom_call.1} parent=11 // pred_fallthru
          _
      $region12: #{tpu_custom_call.1} parent=5 // pred_fallthru
        _
      %p358 = scmp.lt.s32.totalorder %s22, 3
      // Predicated region
      $region33: #{tpu_custom_call.1} parent=5 // pred_check
        %p359 = pneg %p358
      $region34: #{tpu_custom_call.1} parent=5 // pred_check_branch
        %361 = sbr.rel (%p359) target = $region36
      $region35: #{tpu_custom_call.1} parent=5 // pred_region
        // Predicated region
        $region37: #{tpu_custom_call.1} parent=35 // pred_check
          %p362 = pneg %p54
        $region38: #{tpu_custom_call.1} parent=35 // pred_check_branch
          %364 = sbr.rel (%p362) target = $region40
        $region39: #{tpu_custom_call.1} parent=35 // pred_region
          %s365 = sand.u32 %s44, 1
          %s366 = scalar_lea.sflag [#allocation5], %s365
          %s367 = sand.u32 %s44, 1
          %s368 = smul.addr %s367, 8
          %s369 = scalar_lea.vmem [#allocation4], %s368
          %s371 = ssub.s32 128, 128
          %372 = vsyncadd %s366, %s371
          %s373 = smul.addr %s29, 128
          %s374 = scalar_lea.hbm %s0, %s373
          %s376 = sshll.u32 %s369, 4
          %s377 = int_to_ptr.vmem [resolvable:$true] %s376
          %379 = dma.hbm_to_vmem [thread:$0]  %s374, 128, %s377, %s366
        $region40: #{tpu_custom_call.1} parent=35 // pred_fallthru
          _
        // Predicated region
        $region41: #{tpu_custom_call.1} parent=35 // pred_check
          %p380 = pneg %p108
        $region42: #{tpu_custom_call.1} parent=35 // pred_check_branch
          %382 = sbr.rel (%p380) target = $region44
        $region43: #{tpu_custom_call.1} parent=35 // pred_region
          %s383 = smul.u32 3, %s30
          %p384 = scmp.lt.s32.totalorder %s29, 2
          %s385 = scalar_select %p384, %s29, 2
          %p386 = scmp.lt.s32.totalorder %s383, 2
          %s387 = scalar_select %p386, %s383, 2
          %s388 = smul.addr %s385, 3
          %s389 = sadd.s32 %s387, %s388
          %s390 = smul.addr %s389, 8
          %s391 = scalar_lea.vmem %s2, %s390
          %s392 = smul.u32 3, %s30
        $region44: #{tpu_custom_call.1} parent=35 // pred_fallthru
          _
        // Predicated region
        $region45: #{tpu_custom_call.1} parent=35 // pred_check
          %p393 = pneg %p136
        $region46: #{tpu_custom_call.1} parent=35 // pred_check_branch
          %395 = sbr.rel (%p393) target = $region48
        $region47: #{tpu_custom_call.1} parent=35 // pred_region
          %s396 = smul.u32 3, %s30
          %p397 = scmp.lt.s32.totalorder %s29, 2
          %s398 = scalar_select %p397, %s29, 2
          %p399 = scmp.lt.s32.totalorder %s396, 2
          %s400 = scalar_select %p399, %s396, 2
          %s401 = smul.addr %s398, 3
          %s402 = sadd.s32 %s400, %s401
          %s403 = smul.addr %s402, 8
          %s404 = scalar_lea.vmem %s3, %s403
          %s405 = smul.u32 3, %s30
        $region48: #{tpu_custom_call.1} parent=35 // pred_fallthru
          _
        // Predicated region
        $region49: #{tpu_custom_call.1} parent=35 // pred_check
          %p406 = pneg %p162
        $region50: #{tpu_custom_call.1} parent=35 // pred_check_branch
          %408 = sbr.rel (%p406) target = $region52
        $region51: #{tpu_custom_call.1} parent=35 // pred_region
          %p409 = scmp.lt.s32.totalorder %s29, 2
          %s410 = scalar_select %p409, %s29, 2
          %s411 = smul.addr %s410, 8
          %s412 = scalar_lea.vmem %s4, %s411
        $region52: #{tpu_custom_call.1} parent=35 // pred_fallthru
          _
        // Predicated region
        $region53: #{tpu_custom_call.1} parent=35 // pred_check
          %p413 = pneg %p188
        $region54: #{tpu_custom_call.1} parent=35 // pred_check_branch
          %415 = sbr.rel (%p413) target = $region56
        $region55: #{tpu_custom_call.1} parent=35 // pred_region
          %p416 = scmp.lt.s32.totalorder %s29, 2
          %s417 = scalar_select %p416, %s29, 2
          %s418 = smul.addr %s417, 8
          %s419 = scalar_lea.vmem %s5, %s418
        $region56: #{tpu_custom_call.1} parent=35 // pred_fallthru
          _
      $region36: #{tpu_custom_call.1} parent=5 // pred_fallthru
        _
      %p420 = scmp.le.s32.totalorder 1, %s22
      %p421 = scmp.lt.s32.totalorder %s22, 4
      %p422 = pnand %p420, %p421
      %p423 = pneg %p422
      // Predicated region
      $region57: #{tpu_custom_call.1} parent=5 // pred_check
        _
      $region58: #{tpu_custom_call.1} parent=5 // pred_check_branch
        %425 = sbr.rel (%p422) target = $region60
      $region59: #{tpu_custom_call.1} parent=5 // pred_region
        %s426 = ssub.s32 %s22, 1
        %s427 = sand.u32 %s47, 1
        %s428 = scalar_lea.sflag [#allocation5], %s427
        %s429 = sand.u32 %s47, 1
        %s430 = smul.addr %s429, 8
        %s431 = scalar_lea.vmem [#allocation4], %s430
        // Predicated region
        $region61: #{tpu_custom_call.1} parent=59 // pred_check
          %p432 = pneg %p60
        $region62: #{tpu_custom_call.1} parent=59 // pred_check_branch
          %434 = sbr.rel (%p432) target = $region64
        $region63: #{tpu_custom_call.1} parent=59 // pred_region
          %435 = dma.done %s428, 128
        $region64: #{tpu_custom_call.1} parent=59 // pred_fallthru
          _
        // Predicated region
        $region65: #{tpu_custom_call.1} parent=59 // pred_check
          %p436 = pneg %p86
        $region66: #{tpu_custom_call.1} parent=59 // pred_check_branch
          %438 = sbr.rel (%p436) target = $region68
        $region67: #{tpu_custom_call.1} parent=59 // pred_region
          %439 = dma.done [#allocation8], 384
        $region68: #{tpu_custom_call.1} parent=59 // pred_fallthru
          _
        // Predicated region
        $region69: #{tpu_custom_call.1} parent=59 // pred_check
          %p440 = pneg %p236
        $region70: #{tpu_custom_call.1} parent=59 // pred_check_branch
          %442 = sbr.rel (%p440) target = $region72
        $region71: #{tpu_custom_call.1} parent=59 // pred_region
          %443 = dma.done [#allocation8], 16
        $region72: #{tpu_custom_call.1} parent=59 // pred_fallthru
          _
        // Predicated region
        $region73: #{tpu_custom_call.1} parent=59 // pred_check
          %p444 = pneg %p278
        $region74: #{tpu_custom_call.1} parent=59 // pred_check_branch
          %446 = sbr.rel (%p444) target = $region76
        $region75: #{tpu_custom_call.1} parent=59 // pred_region
          %447 = dma.done [#allocation11], 16
        $region76: #{tpu_custom_call.1} parent=59 // pred_fallthru
          _
        %s448 = sand.u32 %s47, 1
        %s449 = scalar_lea.sflag [#allocation5], %s448
        %s450 = sand.u32 %s47, 1
        %s451 = smul.addr %s450, 8
        %s452 = scalar_lea.vmem [#allocation4], %s451
        %p453 = pneg %p60
        %p454 = pneg %p57
        %p455 = pneg %p86
        %p456 = pneg %p83
        %s457 = smul.u32 3, %s32
        %p458 = scmp.lt.s32.totalorder %s31, 2
        %s459 = scalar_select %p458, %s31, 2
        %p460 = scmp.lt.s32.totalorder %s457, 2
        %s461 = scalar_select %p460, %s457, 2
        %s462 = smul.addr %s459, 3
        %s463 = sadd.s32 %s461, %s462
        %s464 = smul.addr %s463, 8
        %s465 = scalar_lea.vmem %s2, %s464
        %p466 = pneg %p114
        %p467 = pneg %p111
        %s468 = smul.u32 3, %s32
        %p469 = scmp.lt.s32.totalorder %s31, 2
        %s470 = scalar_select %p469, %s31, 2
        %p471 = scmp.lt.s32.totalorder %s468, 2
        %s472 = scalar_select %p471, %s468, 2
        %s473 = smul.addr %s470, 3
        %s474 = sadd.s32 %s472, %s473
        %s475 = smul.addr %s474, 8
        %s476 = scalar_lea.vmem %s3, %s475
        %p477 = pneg %p142
        %p478 = pneg %p139
        %p479 = scmp.lt.s32.totalorder %s31, 2
        %s480 = scalar_select %p479, %s31, 2
        %s481 = smul.addr %s480, 8
        %s482 = scalar_lea.vmem %s4, %s481
        %p483 = pneg %p168
        %p484 = pneg %p165
        %p485 = scmp.lt.s32.totalorder %s31, 2
        %s486 = scalar_select %p485, %s31, 2
        %s487 = smul.addr %s486, 8
        %s488 = scalar_lea.vmem %s5, %s487
        %p489 = pneg %p194
        %p490 = pneg %p191
        %p491 = pneg %p215
        %p492 = pneg %p212
        %p493 = pneg %p236
        %p494 = pneg %p233
        %p495 = pneg %p257
        %p496 = pneg %p254
        %p497 = pneg %p278
        %p498 = pneg %p275
        %p499 = pneg %p299
        %p500 = pneg %p296
        %s501 = smul.u32 3, %s32
        %s502 = smul.u32 3, %s32
        %p503 = scmp.lt.s32.totalorder %s31, 2
        %s504 = scalar_select %p503, %s31, 2
        %p505 = scmp.lt.s32.totalorder %s502, 2
        %s506 = scalar_select %p505, %s502, 2
        %s507 = smul.addr %s504, 3
        %s508 = sadd.s32 %s506, %s507
        %s509 = smul.addr %s508, 8
        %s510 = scalar_lea.vmem %s2, %s509
        %s511 = smul.u32 3, %s32
        %s512 = smul.u32 3, %s32
        %p513 = scmp.lt.s32.totalorder %s31, 2
        %s514 = scalar_select %p513, %s31, 2
        %p515 = scmp.lt.s32.totalorder %s512, 2
        %s516 = scalar_select %p515, %s512, 2
        %s517 = smul.addr %s514, 3
        %s518 = sadd.s32 %s516, %s517
        %s519 = smul.addr %s518, 8
        %s520 = scalar_lea.vmem %s3, %s519
        %s521 = smul.u32 3, %s32
        %p522 = scmp.lt.s32.totalorder %s31, 2
        %s523 = scalar_select %p522, %s31, 2
        %s524 = smul.addr %s523, 8
        %s525 = scalar_lea.vmem %s4, %s524
        %p526 = scmp.lt.s32.totalorder %s31, 2
        %s527 = scalar_select %p526, %s31, 2
        %s528 = smul.addr %s527, 8
        %s529 = scalar_lea.vmem %s5, %s528
        %p530 = scmp.eq.s32.totalorder %s31, 0
        %p531 = scmp.eq.s32.totalorder %s32, 0
        %p532 = pnand %p530, %p531
        %p533 = pneg %p532
        // Predicated region
        $region77: #{tpu_custom_call.1} parent=59 // pred_check
          _
        $region78: #{tpu_custom_call.1} parent=59 // pred_check_branch
          %535 = sbr.rel (%p532) target = $region80
        $region79: #{tpu_custom_call.1} parent=59 // pred_region
          %536 = vst [vmem:[#allocation3] sm:$0x1] 0.0
          %537 = vst [vmem:[#allocation12] sm:$0x1] 0.0
        $region80: #{tpu_custom_call.1} parent=59 // pred_fallthru
          _
        %v538 = vld [vmem:[#allocation7] sm:$0xff]
        %v539 = vld [vmem:[#allocation7 + $0x8] sm:$0xff]
        %v540 = vld [vmem:[#allocation7 + $0x10] sm:$0xff]
        %v541 = vld [vmem:[%s510] sm:$0xff]
        %v542 = vld [vmem:[%s510 + $0x8] sm:$0xff]
        %v543 = vld [vmem:[%s510 + $0x10] sm:$0xff]
        %v544 = vld [vmem:[%s520] sm:$0xff]
        %v545 = vld [vmem:[%s520 + $0x8] sm:$0xff]
        %v546 = vld [vmem:[%s520 + $0x10] sm:$0xff]
        %548 = vset.pattern.permute.xlu0 0
        %549 = vperm.xlu0 %548, %v541
        %v550 = vpop.permute.xlu0 %549
        %553 = vset.pattern.permute.xlu0 0
        %554 = vperm.xlu0 %553, %v542
        %v555 = vpop.permute.xlu0 %554
        %558 = vset.pattern.permute.xlu0 0
        %559 = vperm.xlu0 %558, %v543
        %v560 = vpop.permute.xlu0 %559
        %v562 = vmul.f32 %v538, %v550
        %v563 = vmul.f32 %v539, %v555
        %v564 = vmul.f32 %v540, %v560
        %566 = vset.pattern.permute.xlu0 0
        %567 = vperm.xlu0 %566, %v544
        %v568 = vpop.permute.xlu0 %567
        %571 = vset.pattern.permute.xlu0 0
        %572 = vperm.xlu0 %571, %v545
        %v573 = vpop.permute.xlu0 %572
        %576 = vset.pattern.permute.xlu0 0
        %577 = vperm.xlu0 %576, %v546
        %v578 = vpop.permute.xlu0 %577
        %v580 = vadd.f32 %v562, %v568
        %v581 = vadd.f32 %v563, %v573
        %v582 = vadd.f32 %v564, %v578
        %v583 = vmax.f32 %v580, %v581
        %v584 = vmax.f32 %v583, %v582
        %v585 = vrot.slane %v584, 4
        %v586 = vmax.f32 %v584, %v585
        %v587 = vrot.slane %v586, 2
        %v588 = vmax.f32 %v586, %v587
        %v589 = vrot.slane %v588, 1
        %v590 = vmax.f32 %v588, %v589
        %591 = vset.pattern.permute.xlu0 1
        %592 = vperm.xlu0 %591, %v541
        %v593 = vpop.permute.xlu0 %592
        %595 = vset.pattern.permute.xlu0 1
        %596 = vperm.xlu0 %595, %v542
        %v597 = vpop.permute.xlu0 %596
        %599 = vset.pattern.permute.xlu0 1
        %600 = vperm.xlu0 %599, %v543
        %v601 = vpop.permute.xlu0 %600
        %v603 = vmul.f32 %v538, %v593
        %v604 = vmul.f32 %v539, %v597
        %v605 = vmul.f32 %v540, %v601
        %606 = vset.pattern.permute.xlu0 1
        %607 = vperm.xlu0 %606, %v544
        %v608 = vpop.permute.xlu0 %607
        %610 = vset.pattern.permute.xlu0 1
        %611 = vperm.xlu0 %610, %v545
        %v612 = vpop.permute.xlu0 %611
        %614 = vset.pattern.permute.xlu0 1
        %615 = vperm.xlu0 %614, %v546
        %v616 = vpop.permute.xlu0 %615
        %v618 = vadd.f32 %v603, %v608
        %v619 = vadd.f32 %v604, %v612
        %v620 = vadd.f32 %v605, %v616
        %v621 = vmax.f32 %v618, %v619
        %v622 = vmax.f32 %v621, %v620
        %v623 = vrot.slane %v622, 4
        %v624 = vmax.f32 %v622, %v623
        %v625 = vrot.slane %v624, 2
        %v626 = vmax.f32 %v624, %v625
        %v627 = vrot.slane %v626, 1
        %v628 = vmax.f32 %v626, %v627
        %629 = vset.pattern.permute.xlu0 2
        %630 = vperm.xlu0 %629, %v541
        %v631 = vpop.permute.xlu0 %630
        %633 = vset.pattern.permute.xlu0 2
        %634 = vperm.xlu0 %633, %v542
        %v635 = vpop.permute.xlu0 %634
        %637 = vset.pattern.permute.xlu0 2
        %638 = vperm.xlu0 %637, %v543
        %v639 = vpop.permute.xlu0 %638
        %v641 = vmul.f32 %v538, %v631
        %v642 = vmul.f32 %v539, %v635
        %v643 = vmul.f32 %v540, %v639
        %644 = vset.pattern.permute.xlu0 2
        %645 = vperm.xlu0 %644, %v544
        %v646 = vpop.permute.xlu0 %645
        %648 = vset.pattern.permute.xlu0 2
        %649 = vperm.xlu0 %648, %v545
        %v650 = vpop.permute.xlu0 %649
        %652 = vset.pattern.permute.xlu0 2
        %653 = vperm.xlu0 %652, %v546
        %v654 = vpop.permute.xlu0 %653
        %v656 = vadd.f32 %v641, %v646
        %v657 = vadd.f32 %v642, %v650
        %v658 = vadd.f32 %v643, %v654
        %v659 = vmax.f32 %v656, %v657
        %v660 = vmax.f32 %v659, %v658
        %v661 = vrot.slane %v660, 4
        %v662 = vmax.f32 %v660, %v661
        %v663 = vrot.slane %v662, 2
        %v664 = vmax.f32 %v662, %v663
        %v665 = vrot.slane %v664, 1
        %v666 = vmax.f32 %v664, %v665
        %667 = vset.pattern.permute.xlu0 3
        %668 = vperm.xlu0 %667, %v541
        %v669 = vpop.permute.xlu0 %668
        %671 = vset.pattern.permute.xlu0 3
        %672 = vperm.xlu0 %671, %v542
        %v673 = vpop.permute.xlu0 %672
        %675 = vset.pattern.permute.xlu0 3
        %676 = vperm.xlu0 %675, %v543
        %v677 = vpop.permute.xlu0 %676
        %v679 = vmul.f32 %v538, %v669
        %v680 = vmul.f32 %v539, %v673
        %v681 = vmul.f32 %v540, %v677
        %682 = vset.pattern.permute.xlu0 3
        %683 = vperm.xlu0 %682, %v544
        %v684 = vpop.permute.xlu0 %683
        %686 = vset.pattern.permute.xlu0 3
        %687 = vperm.xlu0 %686, %v545
        %v688 = vpop.permute.xlu0 %687
        %690 = vset.pattern.permute.xlu0 3
        %691 = vperm.xlu0 %690, %v546
        %v692 = vpop.permute.xlu0 %691
        %v694 = vadd.f32 %v679, %v684
        %v695 = vadd.f32 %v680, %v688
        %v696 = vadd.f32 %v681, %v692
        %v697 = vmax.f32 %v694, %v695
        %v698 = vmax.f32 %v697, %v696
        %v699 = vrot.slane %v698, 4
        %v700 = vmax.f32 %v698, %v699
        %v701 = vrot.slane %v700, 2
        %v702 = vmax.f32 %v700, %v701
        %v703 = vrot.slane %v702, 1
        %v704 = vmax.f32 %v702, %v703
        %705 = vset.pattern.permute.xlu0 4
        %706 = vperm.xlu0 %705, %v541
        %v707 = vpop.permute.xlu0 %706
        %709 = vset.pattern.permute.xlu0 4
        %710 = vperm.xlu0 %709, %v542
        %v711 = vpop.permute.xlu0 %710
        %713 = vset.pattern.permute.xlu0 4
        %714 = vperm.xlu0 %713, %v543
        %v715 = vpop.permute.xlu0 %714
        %v717 = vmul.f32 %v538, %v707
        %v718 = vmul.f32 %v539, %v711
        %v719 = vmul.f32 %v540, %v715
        %720 = vset.pattern.permute.xlu0 4
        %721 = vperm.xlu0 %720, %v544
        %v722 = vpop.permute.xlu0 %721
        %724 = vset.pattern.permute.xlu0 4
        %725 = vperm.xlu0 %724, %v545
        %v726 = vpop.permute.xlu0 %725
        %728 = vset.pattern.permute.xlu0 4
        %729 = vperm.xlu0 %728, %v546
        %v730 = vpop.permute.xlu0 %729
        %v732 = vadd.f32 %v717, %v722
        %v733 = vadd.f32 %v718, %v726
        %v734 = vadd.f32 %v719, %v730
        %v735 = vmax.f32 %v732, %v733
        %v736 = vmax.f32 %v735, %v734
        %v737 = vrot.slane %v736, 4
        %v738 = vmax.f32 %v736, %v737
        %v739 = vrot.slane %v738, 2
        %v740 = vmax.f32 %v738, %v739
        %v741 = vrot.slane %v740, 1
        %v742 = vmax.f32 %v740, %v741
        %743 = vset.pattern.permute.xlu0 5
        %744 = vperm.xlu0 %743, %v541
        %v745 = vpop.permute.xlu0 %744
        %747 = vset.pattern.permute.xlu0 5
        %748 = vperm.xlu0 %747, %v542
        %v749 = vpop.permute.xlu0 %748
        %751 = vset.pattern.permute.xlu0 5
        %752 = vperm.xlu0 %751, %v543
        %v753 = vpop.permute.xlu0 %752
        %v755 = vmul.f32 %v538, %v745
        %v756 = vmul.f32 %v539, %v749
        %v757 = vmul.f32 %v540, %v753
        %758 = vset.pattern.permute.xlu0 5
        %759 = vperm.xlu0 %758, %v544
        %v760 = vpop.permute.xlu0 %759
        %762 = vset.pattern.permute.xlu0 5
        %763 = vperm.xlu0 %762, %v545
        %v764 = vpop.permute.xlu0 %763
        %766 = vset.pattern.permute.xlu0 5
        %767 = vperm.xlu0 %766, %v546
        %v768 = vpop.permute.xlu0 %767
        %v770 = vadd.f32 %v755, %v760
        %v771 = vadd.f32 %v756, %v764
        %v772 = vadd.f32 %v757, %v768
        %v773 = vmax.f32 %v770, %v771
        %v774 = vmax.f32 %v773, %v772
        %v775 = vrot.slane %v774, 4
        %v776 = vmax.f32 %v774, %v775
        %v777 = vrot.slane %v776, 2
        %v778 = vmax.f32 %v776, %v777
        %v779 = vrot.slane %v778, 1
        %v780 = vmax.f32 %v778, %v779
        %781 = vset.pattern.permute.xlu0 6
        %782 = vperm.xlu0 %781, %v541
        %v783 = vpop.permute.xlu0 %782
        %785 = vset.pattern.permute.xlu0 6
        %786 = vperm.xlu0 %785, %v542
        %v787 = vpop.permute.xlu0 %786
        %789 = vset.pattern.permute.xlu0 6
        %790 = vperm.xlu0 %789, %v543
        %v791 = vpop.permute.xlu0 %790
        %v793 = vmul.f32 %v538, %v783
        %v794 = vmul.f32 %v539, %v787
        %v795 = vmul.f32 %v540, %v791
        %796 = vset.pattern.permute.xlu0 6
        %797 = vperm.xlu0 %796, %v544
        %v798 = vpop.permute.xlu0 %797
        %800 = vset.pattern.permute.xlu0 6
        %801 = vperm.xlu0 %800, %v545
        %v802 = vpop.permute.xlu0 %801
        %804 = vset.pattern.permute.xlu0 6
        %805 = vperm.xlu0 %804, %v546
        %v806 = vpop.permute.xlu0 %805
        %v808 = vadd.f32 %v793, %v798
        %v809 = vadd.f32 %v794, %v802
        %v810 = vadd.f32 %v795, %v806
        %v811 = vmax.f32 %v808, %v809
        %v812 = vmax.f32 %v811, %v810
        %v813 = vrot.slane %v812, 4
        %v814 = vmax.f32 %v812, %v813
        %v815 = vrot.slane %v814, 2
        %v816 = vmax.f32 %v814, %v815
        %v817 = vrot.slane %v816, 1
        %v818 = vmax.f32 %v816, %v817
        %819 = vset.pattern.permute.xlu0 7
        %820 = vperm.xlu0 %819, %v541
        %v821 = vpop.permute.xlu0 %820
        %823 = vset.pattern.permute.xlu0 7
        %824 = vperm.xlu0 %823, %v542
        %v825 = vpop.permute.xlu0 %824
        %827 = vset.pattern.permute.xlu0 7
        %828 = vperm.xlu0 %827, %v543
        %v829 = vpop.permute.xlu0 %828
        %v831 = vmul.f32 %v538, %v821
        %v832 = vmul.f32 %v539, %v825
        %v833 = vmul.f32 %v540, %v829
        %834 = vset.pattern.permute.xlu0 7
        %835 = vperm.xlu0 %834, %v544
        %v836 = vpop.permute.xlu0 %835
        %838 = vset.pattern.permute.xlu0 7
        %839 = vperm.xlu0 %838, %v545
        %v840 = vpop.permute.xlu0 %839
        %842 = vset.pattern.permute.xlu0 7
        %843 = vperm.xlu0 %842, %v546
        %v844 = vpop.permute.xlu0 %843
        %v846 = vadd.f32 %v831, %v836
        %v847 = vadd.f32 %v832, %v840
        %v848 = vadd.f32 %v833, %v844
        %v849 = vmax.f32 %v846, %v847
        %v850 = vmax.f32 %v849, %v848
        %v851 = vrot.slane %v850, 4
        %v852 = vmax.f32 %v850, %v851
        %v853 = vrot.slane %v852, 2
        %v854 = vmax.f32 %v852, %v853
        %v855 = vrot.slane %v854, 1
        %v856 = vmax.f32 %v854, %v855
        %vm857 = vcmask 1040384
        %v858 = vsel %vm857, %v590, %v628
        %vm859 = vcmask 1041408
        %v860 = vsel %vm859, %v858, %v666
        %vm861 = vcmask 1042432
        %v862 = vsel %vm861, %v860, %v704
        %vm863 = vcmask 1043456
        %v864 = vsel %vm863, %v862, %v742
        %vm865 = vcmask 1044480
        %v866 = vsel %vm865, %v864, %v780
        %vm867 = vcmask 1045504
        %v868 = vsel %vm867, %v866, %v818
        %vm869 = vcmask 1046528
        %v870 = vsel %vm869, %v868, %v856
        // Predicated region
        $region81: #{tpu_custom_call.1} parent=59 // pred_check
          %p871 = pneg %p531
        $region82: #{tpu_custom_call.1} parent=59 // pred_check_branch
          %873 = sbr.rel (%p871) target = $region84
        $region83: #{tpu_custom_call.1} parent=59 // pred_region
          %874 = vst [vmem:[#allocation2] sm:$0xff] %v870
        $region84: #{tpu_custom_call.1} parent=59 // pred_fallthru
          _
        %p875 = scmp.ne.s32.totalorder %s32, 0
        // Predicated region
        $region85: #{tpu_custom_call.1} parent=59 // pred_check
          %p876 = pneg %p875
        $region86: #{tpu_custom_call.1} parent=59 // pred_check_branch
          %878 = sbr.rel (%p876) target = $region88
        $region87: #{tpu_custom_call.1} parent=59 // pred_region
          %v879 = vld [vmem:[#allocation2] sm:$0xff]
          %v880 = vmax.f32 %v879, %v870
          %881 = vst [vmem:[#allocation2] sm:$0xff] %v880
        $region88: #{tpu_custom_call.1} parent=59 // pred_fallthru
          _
        // Predicated region
        $region89: #{tpu_custom_call.1} parent=59 // pred_check
          %p882 = pneg %p531
        $region90: #{tpu_custom_call.1} parent=59 // pred_check_branch
          %884 = sbr.rel (%p882) target = $region92
        $region91: #{tpu_custom_call.1} parent=59 // pred_region
          %v885 = vld [vmem:[%s525] sm:$0xff]
          %vm886 = vcmp.gt.f32.partialorder %v885, 0.0
          %v887 = vld [vmem:[#allocation2] sm:$0xff]
          %v888 = vsel %vm886, 1, 0
          %889 = vset.pattern.permute.xlu0 0
          %890 = vperm.xlu0 %889, %v888
          %v891 = vpop.permute.xlu0 %890
          %vm892 = vcmp.eq.s32.totalorder %v891, 1
          %v893 = vsel %vm892, %v887, 0.0
          %v894 = vld [vmem:[%s431] sm:$0xff]
          %v895 = vadd.f32 %v894, %v893
          %v896 = vld [vmem:[%s6] sm:$0xff]
          %v897 = vld [vmem:[%s6 + $0x8] sm:$0xff]
          %v898 = vld [vmem:[%s6 + $0x10] sm:$0xff]
          %v899 = vld [vmem:[%s6 + $0x18] sm:$0xff]
          %v900 = vld [vmem:[%s6 + $0x20] sm:$0xff]
          %v901 = vld [vmem:[%s6 + $0x28] sm:$0xff]
          %v902 = vld [vmem:[%s6 + $0x30] sm:$0xff]
          %v903 = vld [vmem:[%s6 + $0x38] sm:$0xff]
          %v904 = vld [vmem:[%s6 + $0x40] sm:$0xff]
          %v905 = vld [vmem:[%s6 + $0x48] sm:$0xff]
          %v906 = vld [vmem:[%s6 + $0x50] sm:$0xff]
          %v907 = vld [vmem:[%s6 + $0x58] sm:$0xff]
          %v908 = vld [vmem:[%s6 + $0x60] sm:$0xff]
          %v909 = vld [vmem:[%s6 + $0x68] sm:$0xff]
          %v910 = vld [vmem:[%s6 + $0x70] sm:$0xff]
          %v911 = vld [vmem:[%s6 + $0x78] sm:$0xff]
          %v912 = vld [vmem:[#allocation9] sm:$0x1]
          %v914 = vlaneseq
          %v915 = vshrl.u32 %v914, 7
          %v916 = vsub.s32 0, %v915
          %v917 = vrot.slane %v912, %v916
          %919 = vmatprep.subr.mxu0 0.0
          %920 = vmatpush1.msra.mxu0 %v911
          %921 = vmatprep.subr.mxu0 0.0
          %922 = vmatpush1.msra.mxu0 %v910
          %923 = vmatprep.subr.mxu0 0.0
          %924 = vmatpush1.msra.mxu0 %v909
          %925 = vmatprep.subr.mxu0 0.0
          %926 = vmatpush1.msra.mxu0 %v908
          %927 = vmatprep.subr.mxu0 0.0
          %928 = vmatpush1.msra.mxu0 %v907
          %929 = vmatprep.subr.mxu0 0.0
          %930 = vmatpush1.msra.mxu0 %v906
          %931 = vmatprep.subr.mxu0 0.0
          %932 = vmatpush1.msra.mxu0 %v905
          %933 = vmatprep.subr.mxu0 0.0
          %934 = vmatpush1.msra.mxu0 %v904
          %935 = vmatprep.subr.mxu0 0.0
          %936 = vmatpush1.msra.mxu0 %v903
          %937 = vmatprep.subr.mxu0 0.0
          %938 = vmatpush1.msra.mxu0 %v902
          %939 = vmatprep.subr.mxu0 0.0
          %940 = vmatpush1.msra.mxu0 %v901
          %941 = vmatprep.subr.mxu0 0.0
          %942 = vmatpush1.msra.mxu0 %v900
          %943 = vmatprep.subr.mxu0 0.0
          %944 = vmatpush1.msra.mxu0 %v899
          %945 = vmatprep.subr.mxu0 0.0
          %946 = vmatpush1.msra.mxu0 %v898
          %947 = vmatprep.subr.mxu0 0.0
          %948 = vmatpush1.msra.mxu0 %v897
          %949 = vmatprep.subr.mxu0 0.0
          %950 = vmatpush1.msra.mxu0 %v896
          %951 = vmatprep.subr.mxu0 0.0
          %952 = vmatpush2.msra.mxu0 0.0
          %953 = vmatprep.subr.mxu0 0.0
          %954 = vmatpush2.msra.mxu0 0.0
          %955 = vmatprep.subr.mxu0 0.0
          %956 = vmatpush2.msra.mxu0 0.0
          %957 = vmatprep.subr.mxu0 0.0
          %958 = vmatpush2.msra.mxu0 0.0
          %959 = vmatprep.subr.mxu0 0.0
          %960 = vmatpush2.msra.mxu0 0.0
          %961 = vmatprep.subr.mxu0 0.0
          %962 = vmatpush2.msra.mxu0 0.0
          %963 = vmatprep.subr.mxu0 0.0
          %964 = vmatpush2.msra.mxu0 0.0
          %965 = vmatprep.subr.mxu0 0.0
          %966 = vmatpush2.msra.mxu0 0.0
          %967 = vmatprep.subr.mxu0 0.0
          %968 = vmatpush2.msra.mxu0 0.0
          %969 = vmatprep.subr.mxu0 0.0
          %970 = vmatpush2.msra.mxu0 0.0
          %971 = vmatprep.subr.mxu0 0.0
          %972 = vmatpush2.msra.mxu0 0.0
          %973 = vmatprep.subr.mxu0 0.0
          %974 = vmatpush2.msra.mxu0 0.0
          %975 = vmatprep.subr.mxu0 0.0
          %976 = vmatpush2.msra.mxu0 0.0
          %977 = vmatprep.subr.mxu0 0.0
          %978 = vmatpush2.msra.mxu0 0.0
          %979 = vmatprep.subr.mxu0 0.0
          %980 = vmatpush2.msra.mxu0 0.0
          %981 = vmatprep.subr.mxu0 0.0
          %982 = vmatpush2.msra.mxu0 0.0
          %983 = vmatprep.mubr.f32.mxu0 0.0
          %984 = vmatmul.mubr.f32.gmra.mxu0 %v895
          %v985 = vpop.f32.mrf.mxu0
          %v986 = vadd.f32 %v917, %v985
          %v987 = vpop.f32.mrf.mxu0
          %988 = vdwg.mxu0
          %v989 = vadd.f32 %v986, %v894
          %v990 = vld [vmem:[#allocation3] sm:$0x1]
          %v991 = vld [vmem:[%s529] sm:$0xff]
          %993 = vset.pattern.permute.xlu0 0
          %994 = vperm.xlu0 %993, %v991
          %v995 = vpop.permute.xlu0 %994
          %v997 = vmul.f32 %v989, %v995
          %v998 = vrot.slane %v997, 4
          %v999 = vadd.f32 %v997, %v998
          %v1000 = vrot.slane %v999, 2
          %v1001 = vadd.f32 %v999, %v1000
          %v1002 = vrot.slane %v1001, 1
          %v1003 = vadd.f32 %v1001, %v1002
          %v1004 = vadd.f32 %v990, %v1003
          %1005 = vst [vmem:[#allocation3] sm:$0x1] %v1004
        $region92: #{tpu_custom_call.1} parent=59 // pred_fallthru
          _
        %p1006 = scmp.eq.s32.totalorder %s31, 2
        %p1007 = pnand %p1006, %p531
        %p1008 = pneg %p1007
        // Predicated region
        $region93: #{tpu_custom_call.1} parent=59 // pred_check
          _
        $region94: #{tpu_custom_call.1} parent=59 // pred_check_branch
          %1010 = sbr.rel (%p1007) target = $region96
        $region95: #{tpu_custom_call.1} parent=59 // pred_region
          %v1011 = vld [vmem:[#allocation3] sm:$0x1]
          %v1012 = vld [vmem:[%s8] sm:$0xff]
          %v1013 = vld [vmem:[%s8 + $0x8] sm:$0xff]
          %v1014 = vld [vmem:[%s8 + $0x10] sm:$0xff]
          %v1015 = vld [vmem:[%s8 + $0x18] sm:$0xff]
          %v1016 = vld [vmem:[%s8 + $0x20] sm:$0xff]
          %v1017 = vld [vmem:[%s8 + $0x28] sm:$0xff]
          %v1018 = vld [vmem:[%s8 + $0x30] sm:$0xff]
          %v1019 = vld [vmem:[%s8 + $0x38] sm:$0xff]
          %v1020 = vld [vmem:[%s8 + $0x40] sm:$0xff]
          %v1021 = vld [vmem:[%s8 + $0x48] sm:$0xff]
          %v1022 = vld [vmem:[%s8 + $0x50] sm:$0xff]
          %v1023 = vld [vmem:[%s8 + $0x58] sm:$0xff]
          %v1024 = vld [vmem:[%s8 + $0x60] sm:$0xff]
          %v1025 = vld [vmem:[%s8 + $0x68] sm:$0xff]
          %v1026 = vld [vmem:[%s8 + $0x70] sm:$0xff]
          %v1027 = vld [vmem:[%s8 + $0x78] sm:$0xff]
          %v1028 = vld [vmem:[#allocation10] sm:$0x1]
          %1029 = vmatprep.subr.mxu0 0.0
          %1030 = vmatpush1.msra.mxu0 %v1027
          %1031 = vmatprep.subr.mxu0 0.0
          %1032 = vmatpush1.msra.mxu0 %v1026
          %1033 = vmatprep.subr.mxu0 0.0
          %1034 = vmatpush1.msra.mxu0 %v1025
          %1035 = vmatprep.subr.mxu0 0.0
          %1036 = vmatpush1.msra.mxu0 %v1024
          %1037 = vmatprep.subr.mxu0 0.0
          %1038 = vmatpush1.msra.mxu0 %v1023
          %1039 = vmatprep.subr.mxu0 0.0
          %1040 = vmatpush1.msra.mxu0 %v1022
          %1041 = vmatprep.subr.mxu0 0.0
          %1042 = vmatpush1.msra.mxu0 %v1021
          %1043 = vmatprep.subr.mxu0 0.0
          %1044 = vmatpush1.msra.mxu0 %v1020
          %1045 = vmatprep.subr.mxu0 0.0
          %1046 = vmatpush1.msra.mxu0 %v1019
          %1047 = vmatprep.subr.mxu0 0.0
          %1048 = vmatpush1.msra.mxu0 %v1018
          %1049 = vmatprep.subr.mxu0 0.0
          %1050 = vmatpush1.msra.mxu0 %v1017
          %1051 = vmatprep.subr.mxu0 0.0
          %1052 = vmatpush1.msra.mxu0 %v1016
          %1053 = vmatprep.subr.mxu0 0.0
          %1054 = vmatpush1.msra.mxu0 %v1015
          %1055 = vmatprep.subr.mxu0 0.0
          %1056 = vmatpush1.msra.mxu0 %v1014
          %1057 = vmatprep.subr.mxu0 0.0
          %1058 = vmatpush1.msra.mxu0 %v1013
          %1059 = vmatprep.subr.mxu0 0.0
          %1060 = vmatpush1.msra.mxu0 %v1012
          %1061 = vmatprep.subr.mxu0 0.0
          %1062 = vmatpush2.msra.mxu0 0.0
          %1063 = vmatprep.subr.mxu0 0.0
          %1064 = vmatpush2.msra.mxu0 0.0
          %1065 = vmatprep.subr.mxu0 0.0
          %1066 = vmatpush2.msra.mxu0 0.0
          %1067 = vmatprep.subr.mxu0 0.0
          %1068 = vmatpush2.msra.mxu0 0.0
          %1069 = vmatprep.subr.mxu0 0.0
          %1070 = vmatpush2.msra.mxu0 0.0
          %1071 = vmatprep.subr.mxu0 0.0
          %1072 = vmatpush2.msra.mxu0 0.0
          %1073 = vmatprep.subr.mxu0 0.0
          %1074 = vmatpush2.msra.mxu0 0.0
          %1075 = vmatprep.subr.mxu0 0.0
          %1076 = vmatpush2.msra.mxu0 0.0
          %1077 = vmatprep.subr.mxu0 0.0
          %1078 = vmatpush2.msra.mxu0 0.0
          %1079 = vmatprep.subr.mxu0 0.0
          %1080 = vmatpush2.msra.mxu0 0.0
          %1081 = vmatprep.subr.mxu0 0.0
          %1082 = vmatpush2.msra.mxu0 0.0
          %1083 = vmatprep.subr.mxu0 0.0
          %1084 = vmatpush2.msra.mxu0 0.0
          %1085 = vmatprep.subr.mxu0 0.0
          %1086 = vmatpush2.msra.mxu0 0.0
          %1087 = vmatprep.subr.mxu0 0.0
          %1088 = vmatpush2.msra.mxu0 0.0
          %1089 = vmatprep.subr.mxu0 0.0
          %1090 = vmatpush2.msra.mxu0 0.0
          %1091 = vmatprep.subr.mxu0 0.0
          %1092 = vmatpush2.msra.mxu0 0.0
          %1093 = vmatprep.mubr.f32.mxu0 0.0
          %1094 = vmatmul.mubr.f32.gmra.mxu0 %v1011
          %v1095 = vpop.f32.mrf.mxu0
          %v1096 = vadd.f32 %v1028, %v1095
          %v1097 = vpop.f32.mrf.mxu0
          %1098 = vdwg.mxu0
          %1099 = vst [vmem:[#allocation12] sm:$0x1] %v1096
        $region96: #{tpu_custom_call.1} parent=59 // pred_fallthru
          _
        // Predicated region
        $region97: #{tpu_custom_call.1} parent=59 // pred_check
          %p1100 = pneg %p296
        $region98: #{tpu_custom_call.1} parent=59 // pred_check_branch
          %1102 = sbr.rel (%p1100) target = $region100
        $region99: #{tpu_custom_call.1} parent=59 // pred_region
          %s1104 = ssub.s32 16, 16
          %1105 = vsyncadd [#allocation6], %s1104
          %s1107 = sshll.u32 [#allocation12], 4
          %s1108 = int_to_ptr.vmem [resolvable:$true] %s1107
          %1110 = dma.vmem_to_hbm [thread:$0]  %s1108, 16, %s10, [#allocation6]
        $region100: #{tpu_custom_call.1} parent=59 // pred_fallthru
          _
        // Predicated region
        $region101: #{tpu_custom_call.1} parent=59 // pred_check
          %p1111 = pneg %p296
        $region102: #{tpu_custom_call.1} parent=59 // pred_check_branch
          %1113 = sbr.rel (%p1111) target = $region104
        $region103: #{tpu_custom_call.1} parent=59 // pred_region
          %1114 = dma.done [#allocation6], 16
        $region104: #{tpu_custom_call.1} parent=59 // pred_fallthru
          _
      $region60: #{tpu_custom_call.1} parent=5 // pred_fallthru
        _
      %p1115 = scmp.le.s32.totalorder 2, %s22
      // Predicated region
      $region105: #{tpu_custom_call.1} parent=5 // pred_check
        %p1116 = pneg %p1115
      $region106: #{tpu_custom_call.1} parent=5 // pred_check_branch
        %1118 = sbr.rel (%p1116) target = $region108
      $region107: #{tpu_custom_call.1} parent=5 // pred_region
        %s1119 = ssub.s32 %s22, 2
      $region108: #{tpu_custom_call.1} parent=5 // pred_fallthru
        _
    $region6: #{tpu_custom_call.1} parent=1 // loop_footer
      %s26 = sadd.s32 1, %s22
    $region7: #{tpu_custom_call.1} parent=1 // loop_footer_branch
      %21 = sbr.rel target = $region3
    $region8: #{tpu_custom_call.1} parent=1 // loop_exit
      _
    %1120 = vsyncpa [#allocation5], 1
    %s1121 = scalar_lea.sflag [#allocation5], 1
    %1122 = vsyncpa %s1121, 1
    %1123 = vsyncpa [#allocation8], 1
    %1124 = vsyncpa [#allocation11], 1
    %1125 = vsyncpa [#allocation6], 1
    %s1126 = scalar_lea.sflag [#allocation6], 1
    %1127 = vsyncpa %s1126, 1

</llo_original>
